<compile_context>
chip_gen: v7x
topology: tpu7x:2x2x1
jax: 0.10.0
libtpu: 0.0.40
codegen_flags: <defaults>
</compile_context>

<pallas_src>
import functools
from typing import NamedTuple

import jax
import jax.numpy as jnp
from jax.experimental import pallas as pl
from jax.experimental.pallas import tpu as pltpu


class LayerMeta(NamedTuple):
    kernel_size: int
    dilation: int
    c_in: int
    c_out: int
    relu: bool
    residual: bool


def _round_up(x, m):
    return (x + m - 1) // m * m


# ----------------------------------------------------------------------------
# Fused Pallas kernel: whole conv stack for one (batch, time-tile) grid cell.
# ----------------------------------------------------------------------------
def _fused_stack_kernel(*refs, layer_meta, tb, padl, c_buf):
    n_layers = len(layer_meta)
    x_prev_ref, x_cur_ref = refs[0], refs[1]
    w_refs = refs[2:2 + 2 * n_layers]
    out_ref = refs[2 + 2 * n_layers]
    buf = refs[3 + 2 * n_layers]              # VMEM scratch (c_buf, padl + 2*tb)

    width = 2 * tb                            # halo tile + output tile
    first_tile = pl.program_id(1) == 0
    c_in0 = layer_meta[0].c_in

    # Left `padl` columns stay zero: they are every layer's causal zero padding
    # inside the tile.  Data region holds [previous tile | current tile].
    buf[:, :padl] = jnp.zeros((c_buf, padl), buf.dtype)
    buf[:c_in0, padl:padl + tb] = x_prev_ref[0]
    buf[:c_in0, padl + tb:padl + width] = x_cur_ref[0]

    for l, m in enumerate(layer_meta):
        w_ref = w_refs[2 * l]                 # (c_out, K*c_in) bf16, BN scale folded
        s_ref = w_refs[2 * l + 1]             # (c_out, 1) f32, conv bias + BN shift
        k_sz, d, c_in, c_out = m.kernel_size, m.dilation, m.c_in, m.c_out

        # Tap k of a causal dilated conv reads the input shifted right by
        # (K-1-k)*d; the shift is a slice into the zero-padded scratch.
        taps = []
        for k in range(k_sz):
            s = (k_sz - 1 - k) * d
            taps.append(buf[:c_in, padl - s:padl - s + width])

        if c_in % 8 == 0:
            # Collapse the K taps into a single MXU matmul.
            xs = jnp.concatenate(taps, axis=0)                    # (K*c_in, width)
            y = jnp.dot(w_ref[...], xs, preferred_element_type=jnp.float32)
        else:
            # Stem layer with tiny c_in: per-tap accumulation is simplest.
            w_all = w_ref[...]
            y = jnp.zeros((c_out, width), jnp.float32)
            for k in range(k_sz):
                y = y + jnp.dot(w_all[:, k * c_in:(k + 1) * c_in], taps[k],
                                preferred_element_type=jnp.float32)

        y = y + s_ref[...]                                        # bias + BN shift
        if m.relu:
            y = jnp.maximum(y, 0.0)
        if m.residual:
            y = y + taps[-1].astype(jnp.float32)   # tap K-1 (shift 0) == layer input

        if l == n_layers - 1:
            out_ref[0] = y[:, tb:].astype(out_ref.dtype)
        else:
            buf[:c_out, padl:padl + width] = y.astype(buf.dtype)

            # First time-tile: the halo half lies before the sequence start.
            # The next layer's true causal padding there is zero (not "this
            # layer applied to zeros"), so zero it out.
            @pl.when(first_tile)
            def _():
                buf[:c_out, padl:padl + tb] = jnp.zeros((c_out, tb), buf.dtype)


# ----------------------------------------------------------------------------
# Wrapper: one pallas_call for the whole network.
# ----------------------------------------------------------------------------
def causal_conv_net(x_ncw, layer_params, layer_meta, *, time_tile=512):
    """x_ncw: (N, C_in, T) float32 in PyTorch NCW layout -> (N, C_out, T) f32."""
    N, c_in, T = x_ncw.shape
    c_out_final = layer_meta[-1].c_out
    c_buf = max(max(m.c_in for m in layer_meta),
                max(m.c_out for m in layer_meta))

    pads = [m.dilation * (m.kernel_size - 1) for m in layer_meta]
    ctx = sum(pads)                        # total receptive-field context
    pad_max = max(pads)

    tb = max(_round_up(max(ctx, 1), 128),
             min(_round_up(T, 128), _round_up(time_tile, 128)))
    n_tiles = -(-T // tb)
    padl = _round_up(max(pad_max, 1), 128)
    assert ctx <= tb and pad_max <= padl

    # Single cheap pad of the narrow input: one tile of left halo / causal
    # zeros plus right padding up to a whole number of tiles.
    x_bf = x_ncw.astype(jnp.bfloat16)
    x_pad = jnp.pad(x_bf, ((0, 0), (0, 0), (tb, n_tiles * tb - T)))

    in_specs = [
        pl.BlockSpec((1, c_in, tb), lambda n, i: (n, 0, i)),       # halo tile
        pl.BlockSpec((1, c_in, tb), lambda n, i: (n, 0, i + 1)),   # current tile
    ]
    args = [x_pad, x_pad]
    for p, m in zip(layer_params, layer_meta):
        in_specs.append(pl.BlockSpec((m.c_out, m.kernel_size * m.c_in),
                                     lambda n, i: (0, 0)))
        args.append(p["w_stack"])
        in_specs.append(pl.BlockSpec((m.c_out, 1), lambda n, i: (0, 0)))
        args.append(p["shift"].reshape(m.c_out, 1).astype(jnp.float32))

    kernel = functools.partial(_fused_stack_kernel,
                               layer_meta=tuple(layer_meta),
                               tb=tb, padl=padl, c_buf=c_buf)

    out = pl.pallas_call(
        kernel,
        out_shape=jax.ShapeDtypeStruct((N, c_out_final, n_tiles * tb),
                                       jnp.float32),
        grid=(N, n_tiles),
        in_specs=in_specs,
        out_specs=pl.BlockSpec((1, c_out_final, tb), lambda n, i: (n, 0, i)),
        scratch_shapes=[pltpu.VMEM((c_buf, padl + 2 * tb), jnp.bfloat16)],
        compiler_params=pltpu.CompilerParams(
            dimension_semantics=("parallel", "parallel"),
            vmem_limit_bytes=32 * 1024 * 1024),
    )(*args)
    return out[:, :, :T]


# ----------------------------------------------------------------------------
# Parameter construction (deterministic, synthetic)
# ----------------------------------------------------------------------------
def _make_layer(key, c_in, c_out, kernel_size, dilation, relu, residual,
                use_bn, eps=1e-5):
    kw, kb, kg, kbe, km, kv = jax.random.split(key, 6)
    w = 0.1 * jax.random.normal(kw, (kernel_size, c_in, c_out), jnp.float32)
    b = 0.1 * jax.random.normal(kb, (c_out,), jnp.float32)
    if use_bn:
        gamma = 1.0 + 0.1 * jax.random.normal(kg, (c_out,), jnp.float32)
        beta = 0.1 * jax.random.normal(kbe, (c_out,), jnp.float32)
        mean = 0.1 * jax.random.normal(km, (c_out,), jnp.float32)
        var = jnp.abs(jax.random.normal(kv, (c_out,), jnp.float32)) + 0.5
        scale = gamma / jnp.sqrt(var + eps)
        shift = (b - mean) * scale + beta
    else:
        scale = jnp.ones((c_out,), jnp.float32)
        shift = b
    # Fold the BN scale into the conv weights; keep only the additive shift.
    w_eff = (w * scale[None, None, :]).astype(jnp.bfloat16)      # (K, C_in, C_out)
    w_stack = jnp.transpose(w_eff.reshape(kernel_size * c_in, c_out), (1, 0))
    params = dict(w_kio=w_eff, w_stack=w_stack, shift=shift)
    meta = LayerMeta(kernel_size=kernel_size, dilation=dilation,
                     c_in=c_in, c_out=c_out, relu=relu, residual=residual)
    return params, meta


def init_causal_conv_net_params(key, in_channels, hidden_dim, out_channels,
                                kernel_size, n_blocks):
    n_layers = 2 + 3 * n_blocks
    keys = jax.random.split(key, n_layers)
    params, metas = [], []
    idx = 0
    # stem: CausalConv1d(in -> hidden) + BatchNorm1d + ReLU
    p, m = _make_layer(keys[idx], in_channels, hidden_dim, kernel_size, 1,
                       relu=True, residual=False, use_bn=True)
    idx += 1
    params.append(p); metas.append(m)
    # n_blocks x CausalConvBlock: 3 residual units with dilations (1, 3, 9)
    for _ in range(n_blocks):
        for d in (1, 3, 9):
            p, m = _make_layer(keys[idx], hidden_dim, hidden_dim, kernel_size,
                               d, relu=True, residual=True, use_bn=True)
            idx += 1
            params.append(p); metas.append(m)
    # head: CausalConv1d(hidden -> out), no BN, no ReLU
    p, m = _make_layer(keys[idx], hidden_dim, out_channels, kernel_size, 1,
                       relu=False, residual=False, use_bn=False)
    params.append(p); metas.append(m)
    return params, metas


# ----------------------------------------------------------------------------
# Pure-JAX reference with the same (bf16 operand / f32 accumulate) precision.
# ----------------------------------------------------------------------------
def causal_conv_net_ref(x_ncw, layer_params, layer_meta):
    x = jnp.transpose(x_ncw, (0, 2, 1)).astype(jnp.bfloat16)     # NWC
    n_layers = len(layer_meta)
    for idx, (p, m) in enumerate(zip(layer_params, layer_meta)):
        pad = m.dilation * (m.kernel_size - 1)
        y = jax.lax.conv_general_dilated(
            x, p["w_kio"], window_strides=(1,), padding=[(pad, 0)],
            rhs_dilation=(m.dilation,),
            dimension_numbers=("NWC", "WIO", "NWC"),
            preferred_element_type=jnp.float32)
        y = y + p["shift"][None, None, :]
        if m.relu:
            y = jnp.maximum(y, 0.0)
        if m.residual:
            y = y + x.astype(jnp.float32)
        x = y if idx == n_layers - 1 else y.astype(jnp.bfloat16)
    return jnp.transpose(x, (0, 2, 1))


# ----------------------------------------------------------------------------
if __name__ == "__main__":
    key = jax.random.PRNGKey(0)
    kx, kp, kx2 = jax.random.split(key, 3)

    N, in_channels, T = 2, 4, 16
    hidden_dim, out_channels = 32, 8
    kernel_size, n_blocks = 3, 2

    params, metas = init_causal_conv_net_params(
        kp, in_channels, hidden_dim, out_channels, kernel_size, n_blocks)

    # Small demo shape (single time tile).
    x = jax.random.normal(kx, (N, in_channels, T), jnp.float32)
    out = jax.block_until_ready(causal_conv_net(x, params, metas))
    assert out.shape == (N, out_channels, T), out.shape

    ref = causal_conv_net_ref(x, params, metas)
    if not jnp.allclose(out, ref, atol=5e-2, rtol=5e-2):
        err = float(jnp.max(jnp.abs(out - ref)))
        raise AssertionError(f"Pallas output mismatch (max abs err {err})")

    # Longer sequence exercising the multi-time-tile halo path (3 tiles).
    T2 = 300
    x2 = jax.random.normal(kx2, (N, in_channels, T2), jnp.float32)
    out2 = jax.block_until_ready(
        causal_conv_net(x2, params, metas, time_tile=128))
    ref2 = causal_conv_net_ref(x2, params, metas)
    if not jnp.allclose(out2, ref2, atol=5e-2, rtol=5e-2):
        err = float(jnp.max(jnp.abs(out2 - ref2)))
        raise AssertionError(f"Pallas tiled output mismatch (max abs err {err})")

    print("KERNEL_OK")
</pallas_src>

<mosaic_0001>
module attributes {stable_mosaic.version = 11 : i64} {
  func.func @_fused_stack_kernel(%arg0: i32, %arg1: i32, %arg2: memref<1x4x128xbf16, #tpu.memory_space<vmem>>, %arg3: memref<1x4x128xbf16, #tpu.memory_space<vmem>>, %arg4: memref<32x12xbf16, #tpu.memory_space<vmem>>, %arg5: memref<32x1xf32, #tpu.memory_space<vmem>>, %arg6: memref<32x96xbf16, #tpu.memory_space<vmem>>, %arg7: memref<32x1xf32, #tpu.memory_space<vmem>>, %arg8: memref<32x96xbf16, #tpu.memory_space<vmem>>, %arg9: memref<32x1xf32, #tpu.memory_space<vmem>>, %arg10: memref<32x96xbf16, #tpu.memory_space<vmem>>, %arg11: memref<32x1xf32, #tpu.memory_space<vmem>>, %arg12: memref<32x96xbf16, #tpu.memory_space<vmem>>, %arg13: memref<32x1xf32, #tpu.memory_space<vmem>>, %arg14: memref<32x96xbf16, #tpu.memory_space<vmem>>, %arg15: memref<32x1xf32, #tpu.memory_space<vmem>>, %arg16: memref<32x96xbf16, #tpu.memory_space<vmem>>, %arg17: memref<32x1xf32, #tpu.memory_space<vmem>>, %arg18: memref<8x96xbf16, #tpu.memory_space<vmem>>, %arg19: memref<8x1xf32, #tpu.memory_space<vmem>>, %arg20: memref<1x8x128xf32, #tpu.memory_space<vmem>>, %arg21: memref<32x384xbf16, #tpu.memory_space<vmem>>) attributes {dimension_semantics = [#tpu.dimension_semantics<parallel>, #tpu.dimension_semantics<parallel>], iteration_bounds = array<i64: 2, 1>, scalar_prefetch = 0 : i64, scratch_operands = 1 : i64, tpu.core_type = #tpu.core_type<tc>, window_params = [{transform_indices = @transform_0, window_bounds = array<i64: 1, 4, 128>}, {transform_indices = @transform_1, window_bounds = array<i64: 1, 4, 128>}, {pipeline_mode = #tpu.pipeline_mode<synchronous>, transform_indices = @transform_2, window_bounds = array<i64: 32, 12>}, {pipeline_mode = #tpu.pipeline_mode<synchronous>, transform_indices = @transform_3, window_bounds = array<i64: 32, 1>}, {pipeline_mode = #tpu.pipeline_mode<synchronous>, transform_indices = @transform_4, window_bounds = array<i64: 32, 96>}, {pipeline_mode = #tpu.pipeline_mode<synchronous>, transform_indices = @transform_5, window_bounds = array<i64: 32, 1>}, {pipeline_mode = #tpu.pipeline_mode<synchronous>, transform_indices = @transform_6, window_bounds = array<i64: 32, 96>}, {pipeline_mode = #tpu.pipeline_mode<synchronous>, transform_indices = @transform_7, window_bounds = array<i64: 32, 1>}, {pipeline_mode = #tpu.pipeline_mode<synchronous>, transform_indices = @transform_8, window_bounds = array<i64: 32, 96>}, {pipeline_mode = #tpu.pipeline_mode<synchronous>, transform_indices = @transform_9, window_bounds = array<i64: 32, 1>}, {pipeline_mode = #tpu.pipeline_mode<synchronous>, transform_indices = @transform_10, window_bounds = array<i64: 32, 96>}, {pipeline_mode = #tpu.pipeline_mode<synchronous>, transform_indices = @transform_11, window_bounds = array<i64: 32, 1>}, {pipeline_mode = #tpu.pipeline_mode<synchronous>, transform_indices = @transform_12, window_bounds = array<i64: 32, 96>}, {pipeline_mode = #tpu.pipeline_mode<synchronous>, transform_indices = @transform_13, window_bounds = array<i64: 32, 1>}, {pipeline_mode = #tpu.pipeline_mode<synchronous>, transform_indices = @transform_14, window_bounds = array<i64: 32, 96>}, {pipeline_mode = #tpu.pipeline_mode<synchronous>, transform_indices = @transform_15, window_bounds = array<i64: 32, 1>}, {pipeline_mode = #tpu.pipeline_mode<synchronous>, transform_indices = @transform_16, window_bounds = array<i64: 8, 96>}, {pipeline_mode = #tpu.pipeline_mode<synchronous>, transform_indices = @transform_17, window_bounds = array<i64: 8, 1>}, {transform_indices = @transform_18, window_bounds = array<i64: 1, 8, 128>}]} {
    %c0_i32 = arith.constant 0 : i32
    %0 = arith.cmpi eq, %arg1, %c0_i32 : i32
    %cst = arith.constant 0.000000e+00 : bf16
    %1 = vector.broadcast %cst : bf16 to vector<32x128xbf16>
    %c0 = arith.constant 0 : index
    %c0_0 = arith.constant 0 : index
    %2 = vector.load %arg21[%c0, %c0_0] : memref<32x384xbf16, #tpu.memory_space<vmem>>, vector<32x128xbf16>
    tpu.vector_store %arg21[%c0, %c0_0], %1 {strides = array<i32>} : memref<32x384xbf16, #tpu.memory_space<vmem>>, vector<32x128xbf16>,
    %c0_1 = arith.constant 0 : index
    %c0_2 = arith.constant 0 : index
    %c0_3 = arith.constant 0 : index
    %3 = vector.load %arg2[%c0_1, %c0_2, %c0_3] : memref<1x4x128xbf16, #tpu.memory_space<vmem>>, vector<1x4x128xbf16>
    %4 = vector.shape_cast %3 : vector<1x4x128xbf16> to vector<4x128xbf16>
    %c0_4 = arith.constant 0 : index
    %c128 = arith.constant 128 : index
    %5 = vector.load %arg21[%c0_4, %c128] : memref<32x384xbf16, #tpu.memory_space<vmem>>, vector<4x128xbf16>
    tpu.vector_store %arg21[%c0_4, %c128], %4 {strides = array<i32>} : memref<32x384xbf16, #tpu.memory_space<vmem>>, vector<4x128xbf16>,
    %c0_5 = arith.constant 0 : index
    %c0_6 = arith.constant 0 : index
    %c0_7 = arith.constant 0 : index
    %6 = vector.load %arg3[%c0_5, %c0_6, %c0_7] : memref<1x4x128xbf16, #tpu.memory_space<vmem>>, vector<1x4x128xbf16>
    %7 = vector.shape_cast %6 : vector<1x4x128xbf16> to vector<4x128xbf16>
    %c0_8 = arith.constant 0 : index
    %c256 = arith.constant 256 : index
    %8 = vector.load %arg21[%c0_8, %c256] : memref<32x384xbf16, #tpu.memory_space<vmem>>, vector<4x128xbf16>
    tpu.vector_store %arg21[%c0_8, %c256], %7 {strides = array<i32>} : memref<32x384xbf16, #tpu.memory_space<vmem>>, vector<4x128xbf16>,
    %c0_9 = arith.constant 0 : index
    %c126 = arith.constant 126 : index
    %9 = vector.load %arg21[%c0_9, %c126] : memref<32x384xbf16, #tpu.memory_space<vmem>>, vector<4x256xbf16>
    %c0_10 = arith.constant 0 : index
    %c127 = arith.constant 127 : index
    %10 = vector.load %arg21[%c0_10, %c127] : memref<32x384xbf16, #tpu.memory_space<vmem>>, vector<4x256xbf16>
    %c0_11 = arith.constant 0 : index
    %c128_12 = arith.constant 128 : index
    %11 = vector.load %arg21[%c0_11, %c128_12] : memref<32x384xbf16, #tpu.memory_space<vmem>>, vector<4x256xbf16>
    %c0_13 = arith.constant 0 : index
    %c0_14 = arith.constant 0 : index
    %12 = vector.load %arg4[%c0_13, %c0_14] : memref<32x12xbf16, #tpu.memory_space<vmem>>, vector<32x12xbf16>
    %cst_15 = arith.constant 0.000000e+00 : f32
    %13 = vector.broadcast %cst_15 : f32 to vector<32x256xf32>
    %14 = vector.extract_strided_slice %12 {offsets = [0, 0], sizes = [32, 4], strides = [1, 1]} : vector<32x12xbf16> to vector<32x4xbf16>
    %cst_16 = arith.constant dense<0.000000e+00> : vector<32x256xf32>
    %15 = tpu.matmul %14, %9, %cst_16 {dimension_numbers = #tpu.dot_dimension_numbers<[1], [0], [0], [1], [0, 0, 1, 1], [], []>} : vector<32x4xbf16>, vector<4x256xbf16>, vector<32x256xf32> -> vector<32x256xf32>
    %16 = arith.addf %13, %15 : vector<32x256xf32>
    %17 = vector.extract_strided_slice %12 {offsets = [0, 4], sizes = [32, 4], strides = [1, 1]} : vector<32x12xbf16> to vector<32x4xbf16>
    %cst_17 = arith.constant dense<0.000000e+00> : vector<32x256xf32>
    %18 = tpu.matmul %17, %10, %cst_17 {dimension_numbers = #tpu.dot_dimension_numbers<[1], [0], [0], [1], [0, 0, 1, 1], [], []>} : vector<32x4xbf16>, vector<4x256xbf16>, vector<32x256xf32> -> vector<32x256xf32>
    %19 = arith.addf %16, %18 : vector<32x256xf32>
    %20 = vector.extract_strided_slice %12 {offsets = [0, 8], sizes = [32, 4], strides = [1, 1]} : vector<32x12xbf16> to vector<32x4xbf16>
    %cst_18 = arith.constant dense<0.000000e+00> : vector<32x256xf32>
    %21 = tpu.matmul %20, %11, %cst_18 {dimension_numbers = #tpu.dot_dimension_numbers<[1], [0], [0], [1], [0, 0, 1, 1], [], []>} : vector<32x4xbf16>, vector<4x256xbf16>, vector<32x256xf32> -> vector<32x256xf32>
    %22 = arith.addf %19, %21 : vector<32x256xf32>
    %c0_19 = arith.constant 0 : index
    %c0_20 = arith.constant 0 : index
    %23 = vector.load %arg5[%c0_19, %c0_20] : memref<32x1xf32, #tpu.memory_space<vmem>>, vector<32x1xf32>
    %24 = vector.broadcast %23 : vector<32x1xf32> to vector<32x256xf32>
    %25 = arith.addf %22, %24 : vector<32x256xf32>
    %cst_21 = arith.constant 0.000000e+00 : f32
    %26 = vector.broadcast %cst_21 : f32 to vector<32x256xf32>
    %27 = arith.maximumf %25, %26 : vector<32x256xf32>
    %28 = arith.truncf %27 : vector<32x256xf32> to vector<32x256xbf16>
    %c0_22 = arith.constant 0 : index
    %c128_23 = arith.constant 128 : index
    %29 = vector.load %arg21[%c0_22, %c128_23] : memref<32x384xbf16, #tpu.memory_space<vmem>>, vector<32x256xbf16>
    tpu.vector_store %arg21[%c0_22, %c128_23], %28 {strides = array<i32>} : memref<32x384xbf16, #tpu.memory_space<vmem>>, vector<32x256xbf16>,
    %30 = arith.extui %0 : i1 to i32
    %c0_i32_24 = arith.constant 0 : i32
    %31 = arith.cmpi ne, %30, %c0_i32_24 : i32
    scf.if %31 {
      %cst_125 = arith.constant 0.000000e+00 : bf16
      %147 = vector.broadcast %cst_125 : bf16 to vector<32x128xbf16>
      %c0_126 = arith.constant 0 : index
      %c128_127 = arith.constant 128 : index
      %148 = vector.load %arg21[%c0_126, %c128_127] : memref<32x384xbf16, #tpu.memory_space<vmem>>, vector<32x128xbf16>
      tpu.vector_store %arg21[%c0_126, %c128_127], %147 {strides = array<i32>} : memref<32x384xbf16, #tpu.memory_space<vmem>>, vector<32x128xbf16>,
    } else {
    }
    %c0_25 = arith.constant 0 : index
    %c126_26 = arith.constant 126 : index
    %32 = vector.load %arg21[%c0_25, %c126_26] : memref<32x384xbf16, #tpu.memory_space<vmem>>, vector<32x256xbf16>
    %c0_27 = arith.constant 0 : index
    %c127_28 = arith.constant 127 : index
    %33 = vector.load %arg21[%c0_27, %c127_28] : memref<32x384xbf16, #tpu.memory_space<vmem>>, vector<32x256xbf16>
    %c0_29 = arith.constant 0 : index
    %c128_30 = arith.constant 128 : index
    %34 = vector.load %arg21[%c0_29, %c128_30] : memref<32x384xbf16, #tpu.memory_space<vmem>>, vector<32x256xbf16>
    %35 = tpu.concatenate %32, %33, %34 in 0 : vector<32x256xbf16>, vector<32x256xbf16>, vector<32x256xbf16> -> vector<96x256xbf16>
    %c0_31 = arith.constant 0 : index
    %c0_32 = arith.constant 0 : index
    %36 = vector.load %arg6[%c0_31, %c0_32] : memref<32x96xbf16, #tpu.memory_space<vmem>>, vector<32x96xbf16>
    %cst_33 = arith.constant dense<0.000000e+00> : vector<32x256xf32>
    %37 = tpu.matmul %36, %35, %cst_33 {dimension_numbers = #tpu.dot_dimension_numbers<[1], [0], [0], [1], [0, 0, 1, 1], [], []>} : vector<32x96xbf16>, vector<96x256xbf16>, vector<32x256xf32> -> vector<32x256xf32>
    %c0_34 = arith.constant 0 : index
    %c0_35 = arith.constant 0 : index
    %38 = vector.load %arg7[%c0_34, %c0_35] : memref<32x1xf32, #tpu.memory_space<vmem>>, vector<32x1xf32>
    %39 = vector.broadcast %38 : vector<32x1xf32> to vector<32x256xf32>
    %40 = arith.addf %37, %39 : vector<32x256xf32>
    %cst_36 = arith.constant 0.000000e+00 : f32
    %41 = vector.broadcast %cst_36 : f32 to vector<32x256xf32>
    %42 = arith.maximumf %40, %41 : vector<32x256xf32>
    %43 = arith.extf %34 : vector<32x256xbf16> to vector<32x256xf32>
    %44 = arith.addf %42, %43 : vector<32x256xf32>
    %45 = arith.truncf %44 : vector<32x256xf32> to vector<32x256xbf16>
    %c0_37 = arith.constant 0 : index
    %c128_38 = arith.constant 128 : index
    %46 = vector.load %arg21[%c0_37, %c128_38] : memref<32x384xbf16, #tpu.memory_space<vmem>>, vector<32x256xbf16>
    tpu.vector_store %arg21[%c0_37, %c128_38], %45 {strides = array<i32>} : memref<32x384xbf16, #tpu.memory_space<vmem>>, vector<32x256xbf16>,
    %47 = arith.extui %0 : i1 to i32
    %c0_i32_39 = arith.constant 0 : i32
    %48 = arith.cmpi ne, %47, %c0_i32_39 : i32
    scf.if %48 {
      %cst_125 = arith.constant 0.000000e+00 : bf16
      %147 = vector.broadcast %cst_125 : bf16 to vector<32x128xbf16>
      %c0_126 = arith.constant 0 : index
      %c128_127 = arith.constant 128 : index
      %148 = vector.load %arg21[%c0_126, %c128_127] : memref<32x384xbf16, #tpu.memory_space<vmem>>, vector<32x128xbf16>
      tpu.vector_store %arg21[%c0_126, %c128_127], %147 {strides = array<i32>} : memref<32x384xbf16, #tpu.memory_space<vmem>>, vector<32x128xbf16>,
    } else {
    }
    %c0_40 = arith.constant 0 : index
    %c122 = arith.constant 122 : index
    %49 = vector.load %arg21[%c0_40, %c122] : memref<32x384xbf16, #tpu.memory_space<vmem>>, vector<32x256xbf16>
    %c0_41 = arith.constant 0 : index
    %c125 = arith.constant 125 : index
    %50 = vector.load %arg21[%c0_41, %c125] : memref<32x384xbf16, #tpu.memory_space<vmem>>, vector<32x256xbf16>
    %c0_42 = arith.constant 0 : index
    %c128_43 = arith.constant 128 : index
    %51 = vector.load %arg21[%c0_42, %c128_43] : memref<32x384xbf16, #tpu.memory_space<vmem>>, vector<32x256xbf16>
    %52 = tpu.concatenate %49, %50, %51 in 0 : vector<32x256xbf16>, vector<32x256xbf16>, vector<32x256xbf16> -> vector<96x256xbf16>
    %c0_44 = arith.constant 0 : index
    %c0_45 = arith.constant 0 : index
    %53 = vector.load %arg8[%c0_44, %c0_45] : memref<32x96xbf16, #tpu.memory_space<vmem>>, vector<32x96xbf16>
    %cst_46 = arith.constant dense<0.000000e+00> : vector<32x256xf32>
    %54 = tpu.matmul %53, %52, %cst_46 {dimension_numbers = #tpu.dot_dimension_numbers<[1], [0], [0], [1], [0, 0, 1, 1], [], []>} : vector<32x96xbf16>, vector<96x256xbf16>, vector<32x256xf32> -> vector<32x256xf32>
    %c0_47 = arith.constant 0 : index
    %c0_48 = arith.constant 0 : index
    %55 = vector.load %arg9[%c0_47, %c0_48] : memref<32x1xf32, #tpu.memory_space<vmem>>, vector<32x1xf32>
    %56 = vector.broadcast %55 : vector<32x1xf32> to vector<32x256xf32>
    %57 = arith.addf %54, %56 : vector<32x256xf32>
    %cst_49 = arith.constant 0.000000e+00 : f32
    %58 = vector.broadcast %cst_49 : f32 to vector<32x256xf32>
    %59 = arith.maximumf %57, %58 : vector<32x256xf32>
    %60 = arith.extf %51 : vector<32x256xbf16> to vector<32x256xf32>
    %61 = arith.addf %59, %60 : vector<32x256xf32>
    %62 = arith.truncf %61 : vector<32x256xf32> to vector<32x256xbf16>
    %c0_50 = arith.constant 0 : index
    %c128_51 = arith.constant 128 : index
    %63 = vector.load %arg21[%c0_50, %c128_51] : memref<32x384xbf16, #tpu.memory_space<vmem>>, vector<32x256xbf16>
    tpu.vector_store %arg21[%c0_50, %c128_51], %62 {strides = array<i32>} : memref<32x384xbf16, #tpu.memory_space<vmem>>, vector<32x256xbf16>,
    %64 = arith.extui %0 : i1 to i32
    %c0_i32_52 = arith.constant 0 : i32
    %65 = arith.cmpi ne, %64, %c0_i32_52 : i32
    scf.if %65 {
      %cst_125 = arith.constant 0.000000e+00 : bf16
      %147 = vector.broadcast %cst_125 : bf16 to vector<32x128xbf16>
      %c0_126 = arith.constant 0 : index
      %c128_127 = arith.constant 128 : index
      %148 = vector.load %arg21[%c0_126, %c128_127] : memref<32x384xbf16, #tpu.memory_space<vmem>>, vector<32x128xbf16>
      tpu.vector_store %arg21[%c0_126, %c128_127], %147 {strides = array<i32>} : memref<32x384xbf16, #tpu.memory_space<vmem>>, vector<32x128xbf16>,
    } else {
    }
    %c0_53 = arith.constant 0 : index
    %c110 = arith.constant 110 : index
    %66 = vector.load %arg21[%c0_53, %c110] : memref<32x384xbf16, #tpu.memory_space<vmem>>, vector<32x256xbf16>
    %c0_54 = arith.constant 0 : index
    %c119 = arith.constant 119 : index
    %67 = vector.load %arg21[%c0_54, %c119] : memref<32x384xbf16, #tpu.memory_space<vmem>>, vector<32x256xbf16>
    %c0_55 = arith.constant 0 : index
    %c128_56 = arith.constant 128 : index
    %68 = vector.load %arg21[%c0_55, %c128_56] : memref<32x384xbf16, #tpu.memory_space<vmem>>, vector<32x256xbf16>
    %69 = tpu.concatenate %66, %67, %68 in 0 : vector<32x256xbf16>, vector<32x256xbf16>, vector<32x256xbf16> -> vector<96x256xbf16>
    %c0_57 = arith.constant 0 : index
    %c0_58 = arith.constant 0 : index
    %70 = vector.load %arg10[%c0_57, %c0_58] : memref<32x96xbf16, #tpu.memory_space<vmem>>, vector<32x96xbf16>
    %cst_59 = arith.constant dense<0.000000e+00> : vector<32x256xf32>
    %71 = tpu.matmul %70, %69, %cst_59 {dimension_numbers = #tpu.dot_dimension_numbers<[1], [0], [0], [1], [0, 0, 1, 1], [], []>} : vector<32x96xbf16>, vector<96x256xbf16>, vector<32x256xf32> -> vector<32x256xf32>
    %c0_60 = arith.constant 0 : index
    %c0_61 = arith.constant 0 : index
    %72 = vector.load %arg11[%c0_60, %c0_61] : memref<32x1xf32, #tpu.memory_space<vmem>>, vector<32x1xf32>
    %73 = vector.broadcast %72 : vector<32x1xf32> to vector<32x256xf32>
    %74 = arith.addf %71, %73 : vector<32x256xf32>
    %cst_62 = arith.constant 0.000000e+00 : f32
    %75 = vector.broadcast %cst_62 : f32 to vector<32x256xf32>
    %76 = arith.maximumf %74, %75 : vector<32x256xf32>
    %77 = arith.extf %68 : vector<32x256xbf16> to vector<32x256xf32>
    %78 = arith.addf %76, %77 : vector<32x256xf32>
    %79 = arith.truncf %78 : vector<32x256xf32> to vector<32x256xbf16>
    %c0_63 = arith.constant 0 : index
    %c128_64 = arith.constant 128 : index
    %80 = vector.load %arg21[%c0_63, %c128_64] : memref<32x384xbf16, #tpu.memory_space<vmem>>, vector<32x256xbf16>
    tpu.vector_store %arg21[%c0_63, %c128_64], %79 {strides = array<i32>} : memref<32x384xbf16, #tpu.memory_space<vmem>>, vector<32x256xbf16>,
    %81 = arith.extui %0 : i1 to i32
    %c0_i32_65 = arith.constant 0 : i32
    %82 = arith.cmpi ne, %81, %c0_i32_65 : i32
    scf.if %82 {
      %cst_125 = arith.constant 0.000000e+00 : bf16
      %147 = vector.broadcast %cst_125 : bf16 to vector<32x128xbf16>
      %c0_126 = arith.constant 0 : index
      %c128_127 = arith.constant 128 : index
      %148 = vector.load %arg21[%c0_126, %c128_127] : memref<32x384xbf16, #tpu.memory_space<vmem>>, vector<32x128xbf16>
      tpu.vector_store %arg21[%c0_126, %c128_127], %147 {strides = array<i32>} : memref<32x384xbf16, #tpu.memory_space<vmem>>, vector<32x128xbf16>,
    } else {
    }
    %c0_66 = arith.constant 0 : index
    %c126_67 = arith.constant 126 : index
    %83 = vector.load %arg21[%c0_66, %c126_67] : memref<32x384xbf16, #tpu.memory_space<vmem>>, vector<32x256xbf16>
    %c0_68 = arith.constant 0 : index
    %c127_69 = arith.constant 127 : index
    %84 = vector.load %arg21[%c0_68, %c127_69] : memref<32x384xbf16, #tpu.memory_space<vmem>>, vector<32x256xbf16>
    %c0_70 = arith.constant 0 : index
    %c128_71 = arith.constant 128 : index
    %85 = vector.load %arg21[%c0_70, %c128_71] : memref<32x384xbf16, #tpu.memory_space<vmem>>, vector<32x256xbf16>
    %86 = tpu.concatenate %83, %84, %85 in 0 : vector<32x256xbf16>, vector<32x256xbf16>, vector<32x256xbf16> -> vector<96x256xbf16>
    %c0_72 = arith.constant 0 : index
    %c0_73 = arith.constant 0 : index
    %87 = vector.load %arg12[%c0_72, %c0_73] : memref<32x96xbf16, #tpu.memory_space<vmem>>, vector<32x96xbf16>
    %cst_74 = arith.constant dense<0.000000e+00> : vector<32x256xf32>
    %88 = tpu.matmul %87, %86, %cst_74 {dimension_numbers = #tpu.dot_dimension_numbers<[1], [0], [0], [1], [0, 0, 1, 1], [], []>} : vector<32x96xbf16>, vector<96x256xbf16>, vector<32x256xf32> -> vector<32x256xf32>
    %c0_75 = arith.constant 0 : index
    %c0_76 = arith.constant 0 : index
    %89 = vector.load %arg13[%c0_75, %c0_76] : memref<32x1xf32, #tpu.memory_space<vmem>>, vector<32x1xf32>
    %90 = vector.broadcast %89 : vector<32x1xf32> to vector<32x256xf32>
    %91 = arith.addf %88, %90 : vector<32x256xf32>
    %cst_77 = arith.constant 0.000000e+00 : f32
    %92 = vector.broadcast %cst_77 : f32 to vector<32x256xf32>
    %93 = arith.maximumf %91, %92 : vector<32x256xf32>
    %94 = arith.extf %85 : vector<32x256xbf16> to vector<32x256xf32>
    %95 = arith.addf %93, %94 : vector<32x256xf32>
    %96 = arith.truncf %95 : vector<32x256xf32> to vector<32x256xbf16>
    %c0_78 = arith.constant 0 : index
    %c128_79 = arith.constant 128 : index
    %97 = vector.load %arg21[%c0_78, %c128_79] : memref<32x384xbf16, #tpu.memory_space<vmem>>, vector<32x256xbf16>
    tpu.vector_store %arg21[%c0_78, %c128_79], %96 {strides = array<i32>} : memref<32x384xbf16, #tpu.memory_space<vmem>>, vector<32x256xbf16>,
    %98 = arith.extui %0 : i1 to i32
    %c0_i32_80 = arith.constant 0 : i32
    %99 = arith.cmpi ne, %98, %c0_i32_80 : i32
    scf.if %99 {
      %cst_125 = arith.constant 0.000000e+00 : bf16
      %147 = vector.broadcast %cst_125 : bf16 to vector<32x128xbf16>
      %c0_126 = arith.constant 0 : index
      %c128_127 = arith.constant 128 : index
      %148 = vector.load %arg21[%c0_126, %c128_127] : memref<32x384xbf16, #tpu.memory_space<vmem>>, vector<32x128xbf16>
      tpu.vector_store %arg21[%c0_126, %c128_127], %147 {strides = array<i32>} : memref<32x384xbf16, #tpu.memory_space<vmem>>, vector<32x128xbf16>,
    } else {
    }
    %c0_81 = arith.constant 0 : index
    %c122_82 = arith.constant 122 : index
    %100 = vector.load %arg21[%c0_81, %c122_82] : memref<32x384xbf16, #tpu.memory_space<vmem>>, vector<32x256xbf16>
    %c0_83 = arith.constant 0 : index
    %c125_84 = arith.constant 125 : index
    %101 = vector.load %arg21[%c0_83, %c125_84] : memref<32x384xbf16, #tpu.memory_space<vmem>>, vector<32x256xbf16>
    %c0_85 = arith.constant 0 : index
    %c128_86 = arith.constant 128 : index
    %102 = vector.load %arg21[%c0_85, %c128_86] : memref<32x384xbf16, #tpu.memory_space<vmem>>, vector<32x256xbf16>
    %103 = tpu.concatenate %100, %101, %102 in 0 : vector<32x256xbf16>, vector<32x256xbf16>, vector<32x256xbf16> -> vector<96x256xbf16>
    %c0_87 = arith.constant 0 : index
    %c0_88 = arith.constant 0 : index
    %104 = vector.load %arg14[%c0_87, %c0_88] : memref<32x96xbf16, #tpu.memory_space<vmem>>, vector<32x96xbf16>
    %cst_89 = arith.constant dense<0.000000e+00> : vector<32x256xf32>
    %105 = tpu.matmul %104, %103, %cst_89 {dimension_numbers = #tpu.dot_dimension_numbers<[1], [0], [0], [1], [0, 0, 1, 1], [], []>} : vector<32x96xbf16>, vector<96x256xbf16>, vector<32x256xf32> -> vector<32x256xf32>
    %c0_90 = arith.constant 0 : index
    %c0_91 = arith.constant 0 : index
    %106 = vector.load %arg15[%c0_90, %c0_91] : memref<32x1xf32, #tpu.memory_space<vmem>>, vector<32x1xf32>
    %107 = vector.broadcast %106 : vector<32x1xf32> to vector<32x256xf32>
    %108 = arith.addf %105, %107 : vector<32x256xf32>
    %cst_92 = arith.constant 0.000000e+00 : f32
    %109 = vector.broadcast %cst_92 : f32 to vector<32x256xf32>
    %110 = arith.maximumf %108, %109 : vector<32x256xf32>
    %111 = arith.extf %102 : vector<32x256xbf16> to vector<32x256xf32>
    %112 = arith.addf %110, %111 : vector<32x256xf32>
    %113 = arith.truncf %112 : vector<32x256xf32> to vector<32x256xbf16>
    %c0_93 = arith.constant 0 : index
    %c128_94 = arith.constant 128 : index
    %114 = vector.load %arg21[%c0_93, %c128_94] : memref<32x384xbf16, #tpu.memory_space<vmem>>, vector<32x256xbf16>
    tpu.vector_store %arg21[%c0_93, %c128_94], %113 {strides = array<i32>} : memref<32x384xbf16, #tpu.memory_space<vmem>>, vector<32x256xbf16>,
    %115 = arith.extui %0 : i1 to i32
    %c0_i32_95 = arith.constant 0 : i32
    %116 = arith.cmpi ne, %115, %c0_i32_95 : i32
    scf.if %116 {
      %cst_125 = arith.constant 0.000000e+00 : bf16
      %147 = vector.broadcast %cst_125 : bf16 to vector<32x128xbf16>
      %c0_126 = arith.constant 0 : index
      %c128_127 = arith.constant 128 : index
      %148 = vector.load %arg21[%c0_126, %c128_127] : memref<32x384xbf16, #tpu.memory_space<vmem>>, vector<32x128xbf16>
      tpu.vector_store %arg21[%c0_126, %c128_127], %147 {strides = array<i32>} : memref<32x384xbf16, #tpu.memory_space<vmem>>, vector<32x128xbf16>,
    } else {
    }
    %c0_96 = arith.constant 0 : index
    %c110_97 = arith.constant 110 : index
    %117 = vector.load %arg21[%c0_96, %c110_97] : memref<32x384xbf16, #tpu.memory_space<vmem>>, vector<32x256xbf16>
    %c0_98 = arith.constant 0 : index
    %c119_99 = arith.constant 119 : index
    %118 = vector.load %arg21[%c0_98, %c119_99] : memref<32x384xbf16, #tpu.memory_space<vmem>>, vector<32x256xbf16>
    %c0_100 = arith.constant 0 : index
    %c128_101 = arith.constant 128 : index
    %119 = vector.load %arg21[%c0_100, %c128_101] : memref<32x384xbf16, #tpu.memory_space<vmem>>, vector<32x256xbf16>
    %120 = tpu.concatenate %117, %118, %119 in 0 : vector<32x256xbf16>, vector<32x256xbf16>, vector<32x256xbf16> -> vector<96x256xbf16>
    %c0_102 = arith.constant 0 : index
    %c0_103 = arith.constant 0 : index
    %121 = vector.load %arg16[%c0_102, %c0_103] : memref<32x96xbf16, #tpu.memory_space<vmem>>, vector<32x96xbf16>
    %cst_104 = arith.constant dense<0.000000e+00> : vector<32x256xf32>
    %122 = tpu.matmul %121, %120, %cst_104 {dimension_numbers = #tpu.dot_dimension_numbers<[1], [0], [0], [1], [0, 0, 1, 1], [], []>} : vector<32x96xbf16>, vector<96x256xbf16>, vector<32x256xf32> -> vector<32x256xf32>
    %c0_105 = arith.constant 0 : index
    %c0_106 = arith.constant 0 : index
    %123 = vector.load %arg17[%c0_105, %c0_106] : memref<32x1xf32, #tpu.memory_space<vmem>>, vector<32x1xf32>
    %124 = vector.broadcast %123 : vector<32x1xf32> to vector<32x256xf32>
    %125 = arith.addf %122, %124 : vector<32x256xf32>
    %cst_107 = arith.constant 0.000000e+00 : f32
    %126 = vector.broadcast %cst_107 : f32 to vector<32x256xf32>
    %127 = arith.maximumf %125, %126 : vector<32x256xf32>
    %128 = arith.extf %119 : vector<32x256xbf16> to vector<32x256xf32>
    %129 = arith.addf %127, %128 : vector<32x256xf32>
    %130 = arith.truncf %129 : vector<32x256xf32> to vector<32x256xbf16>
    %c0_108 = arith.constant 0 : index
    %c128_109 = arith.constant 128 : index
    %131 = vector.load %arg21[%c0_108, %c128_109] : memref<32x384xbf16, #tpu.memory_space<vmem>>, vector<32x256xbf16>
    tpu.vector_store %arg21[%c0_108, %c128_109], %130 {strides = array<i32>} : memref<32x384xbf16, #tpu.memory_space<vmem>>, vector<32x256xbf16>,
    %132 = arith.extui %0 : i1 to i32
    %c0_i32_110 = arith.constant 0 : i32
    %133 = arith.cmpi ne, %132, %c0_i32_110 : i32
    scf.if %133 {
      %cst_125 = arith.constant 0.000000e+00 : bf16
      %147 = vector.broadcast %cst_125 : bf16 to vector<32x128xbf16>
      %c0_126 = arith.constant 0 : index
      %c128_127 = arith.constant 128 : index
      %148 = vector.load %arg21[%c0_126, %c128_127] : memref<32x384xbf16, #tpu.memory_space<vmem>>, vector<32x128xbf16>
      tpu.vector_store %arg21[%c0_126, %c128_127], %147 {strides = array<i32>} : memref<32x384xbf16, #tpu.memory_space<vmem>>, vector<32x128xbf16>,
    } else {
    }
    %c0_111 = arith.constant 0 : index
    %c126_112 = arith.constant 126 : index
    %134 = vector.load %arg21[%c0_111, %c126_112] : memref<32x384xbf16, #tpu.memory_space<vmem>>, vector<32x256xbf16>
    %c0_113 = arith.constant 0 : index
    %c127_114 = arith.constant 127 : index
    %135 = vector.load %arg21[%c0_113, %c127_114] : memref<32x384xbf16, #tpu.memory_space<vmem>>, vector<32x256xbf16>
    %c0_115 = arith.constant 0 : index
    %c128_116 = arith.constant 128 : index
    %136 = vector.load %arg21[%c0_115, %c128_116] : memref<32x384xbf16, #tpu.memory_space<vmem>>, vector<32x256xbf16>
    %137 = tpu.concatenate %134, %135, %136 in 0 : vector<32x256xbf16>, vector<32x256xbf16>, vector<32x256xbf16> -> vector<96x256xbf16>
    %c0_117 = arith.constant 0 : index
    %c0_118 = arith.constant 0 : index
    %138 = vector.load %arg18[%c0_117, %c0_118] : memref<8x96xbf16, #tpu.memory_space<vmem>>, vector<8x96xbf16>
    %cst_119 = arith.constant dense<0.000000e+00> : vector<8x256xf32>
    %139 = tpu.matmul %138, %137, %cst_119 {dimension_numbers = #tpu.dot_dimension_numbers<[1], [0], [0], [1], [0, 0, 1, 1], [], []>} : vector<8x96xbf16>, vector<96x256xbf16>, vector<8x256xf32> -> vector<8x256xf32>
    %c0_120 = arith.constant 0 : index
    %c0_121 = arith.constant 0 : index
    %140 = vector.load %arg19[%c0_120, %c0_121] : memref<8x1xf32, #tpu.memory_space<vmem>>, vector<8x1xf32>
    %141 = vector.broadcast %140 : vector<8x1xf32> to vector<8x256xf32>
    %142 = arith.addf %139, %141 : vector<8x256xf32>
    %143 = vector.extract_strided_slice %142 {offsets = [0, 128], sizes = [8, 128], strides = [1, 1]} : vector<8x256xf32> to vector<8x128xf32>
    %c0_122 = arith.constant 0 : index
    %c0_123 = arith.constant 0 : index
    %c0_124 = arith.constant 0 : index
    %144 = vector.load %arg20[%c0_122, %c0_123, %c0_124] : memref<1x8x128xf32, #tpu.memory_space<vmem>>, vector<1x8x128xf32>
    %145 = vector.shape_cast %144 : vector<1x8x128xf32> to vector<8x128xf32>
    %146 = vector.shape_cast %143 : vector<8x128xf32> to vector<1x8x128xf32>
    tpu.vector_store %arg20[%c0_122, %c0_123, %c0_124], %146 {strides = array<i32>} : memref<1x8x128xf32, #tpu.memory_space<vmem>>, vector<1x8x128xf32>,
    return
  }
  func.func @transform_0(%arg0: i32, %arg1: i32) -> (i32, i32, i32) {
    %c0_i32 = arith.constant 0 : i32
    %c0_i32_0 = arith.constant 0 : i32
    return %arg0, %c0_i32, %arg1 : i32, i32, i32
  }
  func.func @transform_1(%arg0: i32, %arg1: i32) -> (i32, i32, i32) {
    %c1_i32 = arith.constant 1 : i32
    %0 = arith.addi %arg1, %c1_i32 : i32
    %c0_i32 = arith.constant 0 : i32
    %c0_i32_0 = arith.constant 0 : i32
    return %arg0, %c0_i32, %0 : i32, i32, i32
  }
  func.func @transform_2(%arg0: i32, %arg1: i32) -> (i32, i32) {
    %c0_i32 = arith.constant 0 : i32
    %c0_i32_0 = arith.constant 0 : i32
    %c0_i32_1 = arith.constant 0 : i32
    return %c0_i32, %c0_i32_0 : i32, i32
  }
  func.func @transform_3(%arg0: i32, %arg1: i32) -> (i32, i32) {
    %c0_i32 = arith.constant 0 : i32
    %c0_i32_0 = arith.constant 0 : i32
    %c0_i32_1 = arith.constant 0 : i32
    return %c0_i32, %c0_i32_0 : i32, i32
  }
  func.func @transform_4(%arg0: i32, %arg1: i32) -> (i32, i32) {
    %c0_i32 = arith.constant 0 : i32
    %c0_i32_0 = arith.constant 0 : i32
    %c0_i32_1 = arith.constant 0 : i32
    return %c0_i32, %c0_i32_0 : i32, i32
  }
  func.func @transform_5(%arg0: i32, %arg1: i32) -> (i32, i32) {
    %c0_i32 = arith.constant 0 : i32
    %c0_i32_0 = arith.constant 0 : i32
    %c0_i32_1 = arith.constant 0 : i32
    return %c0_i32, %c0_i32_0 : i32, i32
  }
  func.func @transform_6(%arg0: i32, %arg1: i32) -> (i32, i32) {
    %c0_i32 = arith.constant 0 : i32
    %c0_i32_0 = arith.constant 0 : i32
    %c0_i32_1 = arith.constant 0 : i32
    return %c0_i32, %c0_i32_0 : i32, i32
  }
  func.func @transform_7(%arg0: i32, %arg1: i32) -> (i32, i32) {
    %c0_i32 = arith.constant 0 : i32
    %c0_i32_0 = arith.constant 0 : i32
    %c0_i32_1 = arith.constant 0 : i32
    return %c0_i32, %c0_i32_0 : i32, i32
  }
  func.func @transform_8(%arg0: i32, %arg1: i32) -> (i32, i32) {
    %c0_i32 = arith.constant 0 : i32
    %c0_i32_0 = arith.constant 0 : i32
    %c0_i32_1 = arith.constant 0 : i32
    return %c0_i32, %c0_i32_0 : i32, i32
  }
  func.func @transform_9(%arg0: i32, %arg1: i32) -> (i32, i32) {
    %c0_i32 = arith.constant 0 : i32
    %c0_i32_0 = arith.constant 0 : i32
    %c0_i32_1 = arith.constant 0 : i32
    return %c0_i32, %c0_i32_0 : i32, i32
  }
  func.func @transform_10(%arg0: i32, %arg1: i32) -> (i32, i32) {
    %c0_i32 = arith.constant 0 : i32
    %c0_i32_0 = arith.constant 0 : i32
    %c0_i32_1 = arith.constant 0 : i32
    return %c0_i32, %c0_i32_0 : i32, i32
  }
  func.func @transform_11(%arg0: i32, %arg1: i32) -> (i32, i32) {
    %c0_i32 = arith.constant 0 : i32
    %c0_i32_0 = arith.constant 0 : i32
    %c0_i32_1 = arith.constant 0 : i32
    return %c0_i32, %c0_i32_0 : i32, i32
  }
  func.func @transform_12(%arg0: i32, %arg1: i32) -> (i32, i32) {
    %c0_i32 = arith.constant 0 : i32
    %c0_i32_0 = arith.constant 0 : i32
    %c0_i32_1 = arith.constant 0 : i32
    return %c0_i32, %c0_i32_0 : i32, i32
  }
  func.func @transform_13(%arg0: i32, %arg1: i32) -> (i32, i32) {
    %c0_i32 = arith.constant 0 : i32
    %c0_i32_0 = arith.constant 0 : i32
    %c0_i32_1 = arith.constant 0 : i32
    return %c0_i32, %c0_i32_0 : i32, i32
  }
  func.func @transform_14(%arg0: i32, %arg1: i32) -> (i32, i32) {
    %c0_i32 = arith.constant 0 : i32
    %c0_i32_0 = arith.constant 0 : i32
    %c0_i32_1 = arith.constant 0 : i32
    return %c0_i32, %c0_i32_0 : i32, i32
  }
  func.func @transform_15(%arg0: i32, %arg1: i32) -> (i32, i32) {
    %c0_i32 = arith.constant 0 : i32
    %c0_i32_0 = arith.constant 0 : i32
    %c0_i32_1 = arith.constant 0 : i32
    return %c0_i32, %c0_i32_0 : i32, i32
  }
  func.func @transform_16(%arg0: i32, %arg1: i32) -> (i32, i32) {
    %c0_i32 = arith.constant 0 : i32
    %c0_i32_0 = arith.constant 0 : i32
    %c0_i32_1 = arith.constant 0 : i32
    return %c0_i32, %c0_i32_0 : i32, i32
  }
  func.func @transform_17(%arg0: i32, %arg1: i32) -> (i32, i32) {
    %c0_i32 = arith.constant 0 : i32
    %c0_i32_0 = arith.constant 0 : i32
    %c0_i32_1 = arith.constant 0 : i32
    return %c0_i32, %c0_i32_0 : i32, i32
  }
  func.func @transform_18(%arg0: i32, %arg1: i32) -> (i32, i32, i32) {
    %c0_i32 = arith.constant 0 : i32
    %c0_i32_0 = arith.constant 0 : i32
    return %arg0, %c0_i32, %arg1 : i32, i32, i32
  }
}

</mosaic_0001>

<llo_original>
// kernel: tpu_custom_call.1
$region0: #{tpu_custom_call.1}
  #allocation0 [shape = 'u32[]', space=smem, size = 0x4, offset = 0x4, fixed_abs, tag = 'smem constant byte address 0x4 - core index']
  #allocation1 [shape = 'u32[144,128]{1,0:T(1,128)}', space=vmem, size = 0x12000, scoped, tag = 'internal scratch']
  #allocation2 [shape = 'bf16[32,384]{1,0:T(16,128)(2,1)}', space=vmem, size = 0x6000, scoped, tag = 'scratch operand']
  %s0 = inlined_call_operand.vmem [shape: bf16[2,4,256], index: 0, kind: input, shape index: {}]
  %s1 = inlined_call_operand.vmem [shape: bf16[2,4,256], index: 1, kind: input, shape index: {}]
  %s2 = inlined_call_operand.vmem [shape: bf16[32,12], index: 2, kind: input, shape index: {}]
  %s3 = inlined_call_operand.vmem [shape: f32[32,1], index: 3, kind: input, shape index: {}]
  %s4 = inlined_call_operand.vmem [shape: bf16[32,96], index: 4, kind: input, shape index: {}]
  %s5 = inlined_call_operand.vmem [shape: f32[32,1], index: 5, kind: input, shape index: {}]
  %s6 = inlined_call_operand.vmem [shape: bf16[32,96], index: 6, kind: input, shape index: {}]
  %s7 = inlined_call_operand.vmem [shape: f32[32,1], index: 7, kind: input, shape index: {}]
  %s8 = inlined_call_operand.vmem [shape: bf16[32,96], index: 8, kind: input, shape index: {}]
  %s9 = inlined_call_operand.vmem [shape: f32[32,1], index: 9, kind: input, shape index: {}]
  %s10 = inlined_call_operand.vmem [shape: bf16[32,96], index: 10, kind: input, shape index: {}]
  %s11 = inlined_call_operand.vmem [shape: f32[32,1], index: 11, kind: input, shape index: {}]
  %s12 = inlined_call_operand.vmem [shape: bf16[32,96], index: 12, kind: input, shape index: {}]
  %s13 = inlined_call_operand.vmem [shape: f32[32,1], index: 13, kind: input, shape index: {}]
  %s14 = inlined_call_operand.vmem [shape: bf16[32,96], index: 14, kind: input, shape index: {}]
  %s15 = inlined_call_operand.vmem [shape: f32[32,1], index: 15, kind: input, shape index: {}]
  %s16 = inlined_call_operand.vmem [shape: bf16[8,96], index: 16, kind: input, shape index: {}]
  %s17 = inlined_call_operand.vmem [shape: f32[8,1], index: 17, kind: input, shape index: {}]
  %s18 = inlined_call_operand.hbm [shape: f32[2,8,128], index: 18, kind: output, shape index: {}]
  %s19 = sld [smem:[#allocation0]]
  $region133: #{tpu_custom_call.1} parent=0
    _
  %s21 = ssub.s32 1, %s19
  %s22 = scalar_select 0, %s21, %s19
  $region1: #{tpu_custom_call.1} parent=0
    #allocation3 [shape = 'u8[8192]{0}', space=vmem, size = 0x2000, scoped, tag = 'output window, operand 0']
    #allocation4 [shape = 's32[2]{0}', space=sflag, size = 0x8, scoped, tag = 'scoped memory for tpu_custom_call.1']
    %23 = vsyncpa [#allocation4], 0
    %s24 = scalar_lea.sflag [#allocation4], 1
    %25 = vsyncpa %s24, 0
    loop: start=0, step=1, limit=4
    $region2: #{tpu_custom_call.1} parent=1 // loop_pre_header
      _
    $region3: #{tpu_custom_call.1} parent=1 // loop_header
      %s27 = sphi 0, %s31
      %p28 = scmp.ge.s32.totalorder %s27, 4
      %s34 = sphi 0, %s46
      %s35 = sphi 0, %s42
      %s36 = sphi 0, %s34
      %s37 = sphi 0, %s35
      %s38 = sphi 0, %s36
      %s39 = sphi 0, %s37
      %s51 = sphi 0, %s53
      %s54 = sphi 0, %s51
      %s55 = sphi 0, %s54
      %s71 = sphi 0, %s55
      %s81 = sphi 0, %s83
      %s84 = sphi 0, %s81
      %s85 = sphi 0, %s84
      %s101 = sphi 0, %s85
      %s105 = sphi 0, %s105
      %s107 = sphi 0, %s105
      %s108 = sphi 0, %s107
      %s122 = sphi 0, %s108
      %s126 = sphi 0, %s126
      %s128 = sphi 0, %s126
      %s129 = sphi 0, %s128
      %s143 = sphi 0, %s129
      %s147 = sphi 0, %s147
      %s149 = sphi 0, %s147
      %s150 = sphi 0, %s149
      %s164 = sphi 0, %s150
      %s168 = sphi 0, %s168
      %s170 = sphi 0, %s168
      %s171 = sphi 0, %s170
      %s185 = sphi 0, %s171
      %s189 = sphi 0, %s189
      %s191 = sphi 0, %s189
      %s192 = sphi 0, %s191
      %s206 = sphi 0, %s192
      %s210 = sphi 0, %s210
      %s212 = sphi 0, %s210
      %s213 = sphi 0, %s212
      %s227 = sphi 0, %s213
      %s231 = sphi 0, %s231
      %s233 = sphi 0, %s231
      %s234 = sphi 0, %s233
      %s248 = sphi 0, %s234
      %s252 = sphi 0, %s252
      %s254 = sphi 0, %s252
      %s255 = sphi 0, %s254
      %s269 = sphi 0, %s255
      %s273 = sphi 0, %s273
      %s275 = sphi 0, %s273
      %s276 = sphi 0, %s275
      %s290 = sphi 0, %s276
      %s294 = sphi 0, %s294
      %s296 = sphi 0, %s294
      %s297 = sphi 0, %s296
      %s311 = sphi 0, %s297
      %s315 = sphi 0, %s315
      %s317 = sphi 0, %s315
      %s318 = sphi 0, %s317
      %s332 = sphi 0, %s318
      %s336 = sphi 0, %s336
      %s338 = sphi 0, %s336
      %s339 = sphi 0, %s338
      %s353 = sphi 0, %s339
      %s357 = sphi 0, %s357
      %s359 = sphi 0, %s357
      %s360 = sphi 0, %s359
      %s374 = sphi 0, %s360
      %s378 = sphi 0, %s378
      %s380 = sphi 0, %s378
      %s381 = sphi 0, %s380
      %s395 = sphi 0, %s381
      %s399 = sphi 0, %s399
      %s401 = sphi 0, %s399
      %s402 = sphi 0, %s401
      %s416 = sphi 0, %s402
      %s420 = sphi 0, %s420
      %s422 = sphi 0, %s420
      %s423 = sphi 0, %s422
      %s437 = sphi 0, %s423
      %s445 = sphi 0, %s447
      %s448 = sphi 0, %s445
      %s449 = sphi 0, %s448
      %s465 = sphi 0, %s449
    $region4: #{tpu_custom_call.1} parent=1 // loop_header_branch
      %30 = sbr.rel (%p28) target = $region8
    $region5: #{tpu_custom_call.1} parent=1 // loop_body
      %s32 = ssub.s32 %s27, 1
      %s33 = ssub.s32 %s27, 2
      %s40 = sadd.s32 1, %s35
      %p41 = scmp.ge.s32.totalorder %s40, 1
      %s42 = scalar_select %p41, 0, %s40
      %s43 = sadd.s32 1, %s34
      %s44 = scalar_select %p41, %s43, %s34
      %p45 = scmp.ge.s32.totalorder %s44, 2
      %s46 = scalar_select %p45, 0, %s44
      %s47 = ssub.s32 %s34, %s46
      %s48 = ssub.s32 %s35, %s42
      %s49 = sor.u32 %s47, %s48
      %p50 = scmp.eq.s32.totalorder %s49, 0
      %s52 = sadd.s32 %s51, 1
      %s53 = scalar_select %p50, %s51, %s52
      %p56 = pneg %p50
      %p57 = scmp.eq.s32.totalorder %s27, 1
      %p58 = por %p56, %p57
      %p59 = scmp.ne.s32.totalorder %s51, %s54
      %p60 = scmp.eq.s32.totalorder %s27, 0
      %p61 = por %p59, %p60
      %p62 = scmp.ne.s32.totalorder %s51, %s54
      %p63 = scmp.eq.s32.totalorder %s32, 1
      %p64 = por %p62, %p63
      %p65 = scmp.ne.s32.totalorder %s54, %s55
      %p66 = scmp.eq.s32.totalorder %s32, 0
      %p67 = por %p65, %p66
      %p68 = scmp.ne.s32.totalorder %s54, %s55
      %p69 = scmp.eq.s32.totalorder %s33, 1
      %p70 = por %p68, %p69
      %p72 = scmp.ne.s32.totalorder %s55, %s71
      %p73 = scmp.eq.s32.totalorder %s33, 0
      %p74 = por %p72, %p73
      %s75 = sadd.s32 %s35, 1
      %s76 = sadd.s32 %s42, 1
      %s77 = ssub.s32 %s34, %s46
      %s78 = ssub.s32 %s75, %s76
      %s79 = sor.u32 %s77, %s78
      %p80 = scmp.eq.s32.totalorder %s79, 0
      %s82 = sadd.s32 %s81, 1
      %s83 = scalar_select %p80, %s81, %s82
      %p86 = pneg %p80
      %p87 = scmp.eq.s32.totalorder %s27, 1
      %p88 = por %p86, %p87
      %p89 = scmp.ne.s32.totalorder %s81, %s84
      %p90 = scmp.eq.s32.totalorder %s27, 0
      %p91 = por %p89, %p90
      %p92 = scmp.ne.s32.totalorder %s81, %s84
      %p93 = scmp.eq.s32.totalorder %s32, 1
      %p94 = por %p92, %p93
      %p95 = scmp.ne.s32.totalorder %s84, %s85
      %p96 = scmp.eq.s32.totalorder %s32, 0
      %p97 = por %p95, %p96
      %p98 = scmp.ne.s32.totalorder %s84, %s85
      %p99 = scmp.eq.s32.totalorder %s33, 1
      %p100 = por %p98, %p99
      %p102 = scmp.ne.s32.totalorder %s85, %s101
      %p103 = scmp.eq.s32.totalorder %s33, 0
      %p104 = por %p102, %p103
      %s106 = sadd.s32 %s105, 1
      %p109 = scmp.eq.s32.totalorder %s27, 1
      %p110 = scmp.ne.s32.totalorder %s105, %s107
      %p111 = scmp.eq.s32.totalorder %s27, 0
      %p112 = por %p110, %p111
      %p113 = scmp.ne.s32.totalorder %s105, %s107
      %p114 = scmp.eq.s32.totalorder %s32, 1
      %p115 = por %p113, %p114
      %p116 = scmp.ne.s32.totalorder %s107, %s108
      %p117 = scmp.eq.s32.totalorder %s32, 0
      %p118 = por %p116, %p117
      %p119 = scmp.ne.s32.totalorder %s107, %s108
      %p120 = scmp.eq.s32.totalorder %s33, 1
      %p121 = por %p119, %p120
      %p123 = scmp.ne.s32.totalorder %s108, %s122
      %p124 = scmp.eq.s32.totalorder %s33, 0
      %p125 = por %p123, %p124
      %s127 = sadd.s32 %s126, 1
      %p130 = scmp.eq.s32.totalorder %s27, 1
      %p131 = scmp.ne.s32.totalorder %s126, %s128
      %p132 = scmp.eq.s32.totalorder %s27, 0
      %p133 = por %p131, %p132
      %p134 = scmp.ne.s32.totalorder %s126, %s128
      %p135 = scmp.eq.s32.totalorder %s32, 1
      %p136 = por %p134, %p135
      %p137 = scmp.ne.s32.totalorder %s128, %s129
      %p138 = scmp.eq.s32.totalorder %s32, 0
      %p139 = por %p137, %p138
      %p140 = scmp.ne.s32.totalorder %s128, %s129
      %p141 = scmp.eq.s32.totalorder %s33, 1
      %p142 = por %p140, %p141
      %p144 = scmp.ne.s32.totalorder %s129, %s143
      %p145 = scmp.eq.s32.totalorder %s33, 0
      %p146 = por %p144, %p145
      %s148 = sadd.s32 %s147, 1
      %p151 = scmp.eq.s32.totalorder %s27, 1
      %p152 = scmp.ne.s32.totalorder %s147, %s149
      %p153 = scmp.eq.s32.totalorder %s27, 0
      %p154 = por %p152, %p153
      %p155 = scmp.ne.s32.totalorder %s147, %s149
      %p156 = scmp.eq.s32.totalorder %s32, 1
      %p157 = por %p155, %p156
      %p158 = scmp.ne.s32.totalorder %s149, %s150
      %p159 = scmp.eq.s32.totalorder %s32, 0
      %p160 = por %p158, %p159
      %p161 = scmp.ne.s32.totalorder %s149, %s150
      %p162 = scmp.eq.s32.totalorder %s33, 1
      %p163 = por %p161, %p162
      %p165 = scmp.ne.s32.totalorder %s150, %s164
      %p166 = scmp.eq.s32.totalorder %s33, 0
      %p167 = por %p165, %p166
      %s169 = sadd.s32 %s168, 1
      %p172 = scmp.eq.s32.totalorder %s27, 1
      %p173 = scmp.ne.s32.totalorder %s168, %s170
      %p174 = scmp.eq.s32.totalorder %s27, 0
      %p175 = por %p173, %p174
      %p176 = scmp.ne.s32.totalorder %s168, %s170
      %p177 = scmp.eq.s32.totalorder %s32, 1
      %p178 = por %p176, %p177
      %p179 = scmp.ne.s32.totalorder %s170, %s171
      %p180 = scmp.eq.s32.totalorder %s32, 0
      %p181 = por %p179, %p180
      %p182 = scmp.ne.s32.totalorder %s170, %s171
      %p183 = scmp.eq.s32.totalorder %s33, 1
      %p184 = por %p182, %p183
      %p186 = scmp.ne.s32.totalorder %s171, %s185
      %p187 = scmp.eq.s32.totalorder %s33, 0
      %p188 = por %p186, %p187
      %s190 = sadd.s32 %s189, 1
      %p193 = scmp.eq.s32.totalorder %s27, 1
      %p194 = scmp.ne.s32.totalorder %s189, %s191
      %p195 = scmp.eq.s32.totalorder %s27, 0
      %p196 = por %p194, %p195
      %p197 = scmp.ne.s32.totalorder %s189, %s191
      %p198 = scmp.eq.s32.totalorder %s32, 1
      %p199 = por %p197, %p198
      %p200 = scmp.ne.s32.totalorder %s191, %s192
      %p201 = scmp.eq.s32.totalorder %s32, 0
      %p202 = por %p200, %p201
      %p203 = scmp.ne.s32.totalorder %s191, %s192
      %p204 = scmp.eq.s32.totalorder %s33, 1
      %p205 = por %p203, %p204
      %p207 = scmp.ne.s32.totalorder %s192, %s206
      %p208 = scmp.eq.s32.totalorder %s33, 0
      %p209 = por %p207, %p208
      %s211 = sadd.s32 %s210, 1
      %p214 = scmp.eq.s32.totalorder %s27, 1
      %p215 = scmp.ne.s32.totalorder %s210, %s212
      %p216 = scmp.eq.s32.totalorder %s27, 0
      %p217 = por %p215, %p216
      %p218 = scmp.ne.s32.totalorder %s210, %s212
      %p219 = scmp.eq.s32.totalorder %s32, 1
      %p220 = por %p218, %p219
      %p221 = scmp.ne.s32.totalorder %s212, %s213
      %p222 = scmp.eq.s32.totalorder %s32, 0
      %p223 = por %p221, %p222
      %p224 = scmp.ne.s32.totalorder %s212, %s213
      %p225 = scmp.eq.s32.totalorder %s33, 1
      %p226 = por %p224, %p225
      %p228 = scmp.ne.s32.totalorder %s213, %s227
      %p229 = scmp.eq.s32.totalorder %s33, 0
      %p230 = por %p228, %p229
      %s232 = sadd.s32 %s231, 1
      %p235 = scmp.eq.s32.totalorder %s27, 1
      %p236 = scmp.ne.s32.totalorder %s231, %s233
      %p237 = scmp.eq.s32.totalorder %s27, 0
      %p238 = por %p236, %p237
      %p239 = scmp.ne.s32.totalorder %s231, %s233
      %p240 = scmp.eq.s32.totalorder %s32, 1
      %p241 = por %p239, %p240
      %p242 = scmp.ne.s32.totalorder %s233, %s234
      %p243 = scmp.eq.s32.totalorder %s32, 0
      %p244 = por %p242, %p243
      %p245 = scmp.ne.s32.totalorder %s233, %s234
      %p246 = scmp.eq.s32.totalorder %s33, 1
      %p247 = por %p245, %p246
      %p249 = scmp.ne.s32.totalorder %s234, %s248
      %p250 = scmp.eq.s32.totalorder %s33, 0
      %p251 = por %p249, %p250
      %s253 = sadd.s32 %s252, 1
      %p256 = scmp.eq.s32.totalorder %s27, 1
      %p257 = scmp.ne.s32.totalorder %s252, %s254
      %p258 = scmp.eq.s32.totalorder %s27, 0
      %p259 = por %p257, %p258
      %p260 = scmp.ne.s32.totalorder %s252, %s254
      %p261 = scmp.eq.s32.totalorder %s32, 1
      %p262 = por %p260, %p261
      %p263 = scmp.ne.s32.totalorder %s254, %s255
      %p264 = scmp.eq.s32.totalorder %s32, 0
      %p265 = por %p263, %p264
      %p266 = scmp.ne.s32.totalorder %s254, %s255
      %p267 = scmp.eq.s32.totalorder %s33, 1
      %p268 = por %p266, %p267
      %p270 = scmp.ne.s32.totalorder %s255, %s269
      %p271 = scmp.eq.s32.totalorder %s33, 0
      %p272 = por %p270, %p271
      %s274 = sadd.s32 %s273, 1
      %p277 = scmp.eq.s32.totalorder %s27, 1
      %p278 = scmp.ne.s32.totalorder %s273, %s275
      %p279 = scmp.eq.s32.totalorder %s27, 0
      %p280 = por %p278, %p279
      %p281 = scmp.ne.s32.totalorder %s273, %s275
      %p282 = scmp.eq.s32.totalorder %s32, 1
      %p283 = por %p281, %p282
      %p284 = scmp.ne.s32.totalorder %s275, %s276
      %p285 = scmp.eq.s32.totalorder %s32, 0
      %p286 = por %p284, %p285
      %p287 = scmp.ne.s32.totalorder %s275, %s276
      %p288 = scmp.eq.s32.totalorder %s33, 1
      %p289 = por %p287, %p288
      %p291 = scmp.ne.s32.totalorder %s276, %s290
      %p292 = scmp.eq.s32.totalorder %s33, 0
      %p293 = por %p291, %p292
      %s295 = sadd.s32 %s294, 1
      %p298 = scmp.eq.s32.totalorder %s27, 1
      %p299 = scmp.ne.s32.totalorder %s294, %s296
      %p300 = scmp.eq.s32.totalorder %s27, 0
      %p301 = por %p299, %p300
      %p302 = scmp.ne.s32.totalorder %s294, %s296
      %p303 = scmp.eq.s32.totalorder %s32, 1
      %p304 = por %p302, %p303
      %p305 = scmp.ne.s32.totalorder %s296, %s297
      %p306 = scmp.eq.s32.totalorder %s32, 0
      %p307 = por %p305, %p306
      %p308 = scmp.ne.s32.totalorder %s296, %s297
      %p309 = scmp.eq.s32.totalorder %s33, 1
      %p310 = por %p308, %p309
      %p312 = scmp.ne.s32.totalorder %s297, %s311
      %p313 = scmp.eq.s32.totalorder %s33, 0
      %p314 = por %p312, %p313
      %s316 = sadd.s32 %s315, 1
      %p319 = scmp.eq.s32.totalorder %s27, 1
      %p320 = scmp.ne.s32.totalorder %s315, %s317
      %p321 = scmp.eq.s32.totalorder %s27, 0
      %p322 = por %p320, %p321
      %p323 = scmp.ne.s32.totalorder %s315, %s317
      %p324 = scmp.eq.s32.totalorder %s32, 1
      %p325 = por %p323, %p324
      %p326 = scmp.ne.s32.totalorder %s317, %s318
      %p327 = scmp.eq.s32.totalorder %s32, 0
      %p328 = por %p326, %p327
      %p329 = scmp.ne.s32.totalorder %s317, %s318
      %p330 = scmp.eq.s32.totalorder %s33, 1
      %p331 = por %p329, %p330
      %p333 = scmp.ne.s32.totalorder %s318, %s332
      %p334 = scmp.eq.s32.totalorder %s33, 0
      %p335 = por %p333, %p334
      %s337 = sadd.s32 %s336, 1
      %p340 = scmp.eq.s32.totalorder %s27, 1
      %p341 = scmp.ne.s32.totalorder %s336, %s338
      %p342 = scmp.eq.s32.totalorder %s27, 0
      %p343 = por %p341, %p342
      %p344 = scmp.ne.s32.totalorder %s336, %s338
      %p345 = scmp.eq.s32.totalorder %s32, 1
      %p346 = por %p344, %p345
      %p347 = scmp.ne.s32.totalorder %s338, %s339
      %p348 = scmp.eq.s32.totalorder %s32, 0
      %p349 = por %p347, %p348
      %p350 = scmp.ne.s32.totalorder %s338, %s339
      %p351 = scmp.eq.s32.totalorder %s33, 1
      %p352 = por %p350, %p351
      %p354 = scmp.ne.s32.totalorder %s339, %s353
      %p355 = scmp.eq.s32.totalorder %s33, 0
      %p356 = por %p354, %p355
      %s358 = sadd.s32 %s357, 1
      %p361 = scmp.eq.s32.totalorder %s27, 1
      %p362 = scmp.ne.s32.totalorder %s357, %s359
      %p363 = scmp.eq.s32.totalorder %s27, 0
      %p364 = por %p362, %p363
      %p365 = scmp.ne.s32.totalorder %s357, %s359
      %p366 = scmp.eq.s32.totalorder %s32, 1
      %p367 = por %p365, %p366
      %p368 = scmp.ne.s32.totalorder %s359, %s360
      %p369 = scmp.eq.s32.totalorder %s32, 0
      %p370 = por %p368, %p369
      %p371 = scmp.ne.s32.totalorder %s359, %s360
      %p372 = scmp.eq.s32.totalorder %s33, 1
      %p373 = por %p371, %p372
      %p375 = scmp.ne.s32.totalorder %s360, %s374
      %p376 = scmp.eq.s32.totalorder %s33, 0
      %p377 = por %p375, %p376
      %s379 = sadd.s32 %s378, 1
      %p382 = scmp.eq.s32.totalorder %s27, 1
      %p383 = scmp.ne.s32.totalorder %s378, %s380
      %p384 = scmp.eq.s32.totalorder %s27, 0
      %p385 = por %p383, %p384
      %p386 = scmp.ne.s32.totalorder %s378, %s380
      %p387 = scmp.eq.s32.totalorder %s32, 1
      %p388 = por %p386, %p387
      %p389 = scmp.ne.s32.totalorder %s380, %s381
      %p390 = scmp.eq.s32.totalorder %s32, 0
      %p391 = por %p389, %p390
      %p392 = scmp.ne.s32.totalorder %s380, %s381
      %p393 = scmp.eq.s32.totalorder %s33, 1
      %p394 = por %p392, %p393
      %p396 = scmp.ne.s32.totalorder %s381, %s395
      %p397 = scmp.eq.s32.totalorder %s33, 0
      %p398 = por %p396, %p397
      %s400 = sadd.s32 %s399, 1
      %p403 = scmp.eq.s32.totalorder %s27, 1
      %p404 = scmp.ne.s32.totalorder %s399, %s401
      %p405 = scmp.eq.s32.totalorder %s27, 0
      %p406 = por %p404, %p405
      %p407 = scmp.ne.s32.totalorder %s399, %s401
      %p408 = scmp.eq.s32.totalorder %s32, 1
      %p409 = por %p407, %p408
      %p410 = scmp.ne.s32.totalorder %s401, %s402
      %p411 = scmp.eq.s32.totalorder %s32, 0
      %p412 = por %p410, %p411
      %p413 = scmp.ne.s32.totalorder %s401, %s402
      %p414 = scmp.eq.s32.totalorder %s33, 1
      %p415 = por %p413, %p414
      %p417 = scmp.ne.s32.totalorder %s402, %s416
      %p418 = scmp.eq.s32.totalorder %s33, 0
      %p419 = por %p417, %p418
      %s421 = sadd.s32 %s420, 1
      %p424 = scmp.eq.s32.totalorder %s27, 1
      %p425 = scmp.ne.s32.totalorder %s420, %s422
      %p426 = scmp.eq.s32.totalorder %s27, 0
      %p427 = por %p425, %p426
      %p428 = scmp.ne.s32.totalorder %s420, %s422
      %p429 = scmp.eq.s32.totalorder %s32, 1
      %p430 = por %p428, %p429
      %p431 = scmp.ne.s32.totalorder %s422, %s423
      %p432 = scmp.eq.s32.totalorder %s32, 0
      %p433 = por %p431, %p432
      %p434 = scmp.ne.s32.totalorder %s422, %s423
      %p435 = scmp.eq.s32.totalorder %s33, 1
      %p436 = por %p434, %p435
      %p438 = scmp.ne.s32.totalorder %s423, %s437
      %p439 = scmp.eq.s32.totalorder %s33, 0
      %p440 = por %p438, %p439
      %s441 = ssub.s32 %s34, %s46
      %s442 = ssub.s32 %s35, %s42
      %s443 = sor.u32 %s441, %s442
      %p444 = scmp.eq.s32.totalorder %s443, 0
      %s446 = sadd.s32 %s445, 1
      %s447 = scalar_select %p444, %s445, %s446
      %p450 = pneg %p444
      %p451 = scmp.eq.s32.totalorder %s27, 1
      %p452 = por %p450, %p451
      %p453 = scmp.ne.s32.totalorder %s445, %s448
      %p454 = scmp.eq.s32.totalorder %s27, 0
      %p455 = por %p453, %p454
      %p456 = scmp.ne.s32.totalorder %s445, %s448
      %p457 = scmp.eq.s32.totalorder %s32, 1
      %p458 = por %p456, %p457
      %p459 = scmp.ne.s32.totalorder %s448, %s449
      %p460 = scmp.eq.s32.totalorder %s32, 0
      %p461 = por %p459, %p460
      %p462 = scmp.ne.s32.totalorder %s448, %s449
      %p463 = scmp.eq.s32.totalorder %s33, 1
      %p464 = por %p462, %p463
      %p466 = scmp.ne.s32.totalorder %s449, %s465
      %p467 = scmp.eq.s32.totalorder %s33, 0
      %p468 = por %p466, %p467
      %p469 = scmp.le.s32.totalorder 1, %s27
      %p470 = scmp.lt.s32.totalorder %s27, 3
      %p471 = pnand %p469, %p470
      %p472 = pneg %p471
      // Predicated region
      $region9: #{tpu_custom_call.1} parent=5 // pred_check
        _
      $region10: #{tpu_custom_call.1} parent=5 // pred_check_branch
        %474 = sbr.rel (%p471) target = $region12
      $region11: #{tpu_custom_call.1} parent=5 // pred_region
        %s475 = ssub.s32 %s27, 1
        // Predicated region
        $region13: #{tpu_custom_call.1} parent=11 // pred_check
          %p476 = pneg %p118
        $region14: #{tpu_custom_call.1} parent=11 // pred_check_branch
          %478 = sbr.rel (%p476) target = $region16
        $region15: #{tpu_custom_call.1} parent=11 // pred_region
          _
        $region16: #{tpu_custom_call.1} parent=11 // pred_fallthru
          _
        // Predicated region
        $region17: #{tpu_custom_call.1} parent=11 // pred_check
          %p479 = pneg %p139
        $region18: #{tpu_custom_call.1} parent=11 // pred_check_branch
          %481 = sbr.rel (%p479) target = $region20
        $region19: #{tpu_custom_call.1} parent=11 // pred_region
          _
        $region20: #{tpu_custom_call.1} parent=11 // pred_fallthru
          _
        // Predicated region
        $region21: #{tpu_custom_call.1} parent=11 // pred_check
          %p482 = pneg %p160
        $region22: #{tpu_custom_call.1} parent=11 // pred_check_branch
          %484 = sbr.rel (%p482) target = $region24
        $region23: #{tpu_custom_call.1} parent=11 // pred_region
          _
        $region24: #{tpu_custom_call.1} parent=11 // pred_fallthru
          _
        // Predicated region
        $region25: #{tpu_custom_call.1} parent=11 // pred_check
          %p485 = pneg %p181
        $region26: #{tpu_custom_call.1} parent=11 // pred_check_branch
          %487 = sbr.rel (%p485) target = $region28
        $region27: #{tpu_custom_call.1} parent=11 // pred_region
          _
        $region28: #{tpu_custom_call.1} parent=11 // pred_fallthru
          _
        // Predicated region
        $region29: #{tpu_custom_call.1} parent=11 // pred_check
          %p488 = pneg %p202
        $region30: #{tpu_custom_call.1} parent=11 // pred_check_branch
          %490 = sbr.rel (%p488) target = $region32
        $region31: #{tpu_custom_call.1} parent=11 // pred_region
          _
        $region32: #{tpu_custom_call.1} parent=11 // pred_fallthru
          _
        // Predicated region
        $region33: #{tpu_custom_call.1} parent=11 // pred_check
          %p491 = pneg %p223
        $region34: #{tpu_custom_call.1} parent=11 // pred_check_branch
          %493 = sbr.rel (%p491) target = $region36
        $region35: #{tpu_custom_call.1} parent=11 // pred_region
          _
        $region36: #{tpu_custom_call.1} parent=11 // pred_fallthru
          _
        // Predicated region
        $region37: #{tpu_custom_call.1} parent=11 // pred_check
          %p494 = pneg %p244
        $region38: #{tpu_custom_call.1} parent=11 // pred_check_branch
          %496 = sbr.rel (%p494) target = $region40
        $region39: #{tpu_custom_call.1} parent=11 // pred_region
          _
        $region40: #{tpu_custom_call.1} parent=11 // pred_fallthru
          _
        // Predicated region
        $region41: #{tpu_custom_call.1} parent=11 // pred_check
          %p497 = pneg %p265
        $region42: #{tpu_custom_call.1} parent=11 // pred_check_branch
          %499 = sbr.rel (%p497) target = $region44
        $region43: #{tpu_custom_call.1} parent=11 // pred_region
          _
        $region44: #{tpu_custom_call.1} parent=11 // pred_fallthru
          _
        // Predicated region
        $region45: #{tpu_custom_call.1} parent=11 // pred_check
          %p500 = pneg %p286
        $region46: #{tpu_custom_call.1} parent=11 // pred_check_branch
          %502 = sbr.rel (%p500) target = $region48
        $region47: #{tpu_custom_call.1} parent=11 // pred_region
          _
        $region48: #{tpu_custom_call.1} parent=11 // pred_fallthru
          _
        // Predicated region
        $region49: #{tpu_custom_call.1} parent=11 // pred_check
          %p503 = pneg %p307
        $region50: #{tpu_custom_call.1} parent=11 // pred_check_branch
          %505 = sbr.rel (%p503) target = $region52
        $region51: #{tpu_custom_call.1} parent=11 // pred_region
          _
        $region52: #{tpu_custom_call.1} parent=11 // pred_fallthru
          _
        // Predicated region
        $region53: #{tpu_custom_call.1} parent=11 // pred_check
          %p506 = pneg %p328
        $region54: #{tpu_custom_call.1} parent=11 // pred_check_branch
          %508 = sbr.rel (%p506) target = $region56
        $region55: #{tpu_custom_call.1} parent=11 // pred_region
          _
        $region56: #{tpu_custom_call.1} parent=11 // pred_fallthru
          _
        // Predicated region
        $region57: #{tpu_custom_call.1} parent=11 // pred_check
          %p509 = pneg %p349
        $region58: #{tpu_custom_call.1} parent=11 // pred_check_branch
          %511 = sbr.rel (%p509) target = $region60
        $region59: #{tpu_custom_call.1} parent=11 // pred_region
          _
        $region60: #{tpu_custom_call.1} parent=11 // pred_fallthru
          _
        // Predicated region
        $region61: #{tpu_custom_call.1} parent=11 // pred_check
          %p512 = pneg %p370
        $region62: #{tpu_custom_call.1} parent=11 // pred_check_branch
          %514 = sbr.rel (%p512) target = $region64
        $region63: #{tpu_custom_call.1} parent=11 // pred_region
          _
        $region64: #{tpu_custom_call.1} parent=11 // pred_fallthru
          _
        // Predicated region
        $region65: #{tpu_custom_call.1} parent=11 // pred_check
          %p515 = pneg %p391
        $region66: #{tpu_custom_call.1} parent=11 // pred_check_branch
          %517 = sbr.rel (%p515) target = $region68
        $region67: #{tpu_custom_call.1} parent=11 // pred_region
          _
        $region68: #{tpu_custom_call.1} parent=11 // pred_fallthru
          _
        // Predicated region
        $region69: #{tpu_custom_call.1} parent=11 // pred_check
          %p518 = pneg %p412
        $region70: #{tpu_custom_call.1} parent=11 // pred_check_branch
          %520 = sbr.rel (%p518) target = $region72
        $region71: #{tpu_custom_call.1} parent=11 // pred_region
          _
        $region72: #{tpu_custom_call.1} parent=11 // pred_fallthru
          _
        // Predicated region
        $region73: #{tpu_custom_call.1} parent=11 // pred_check
          %p521 = pneg %p433
        $region74: #{tpu_custom_call.1} parent=11 // pred_check_branch
          %523 = sbr.rel (%p521) target = $region76
        $region75: #{tpu_custom_call.1} parent=11 // pred_region
          _
        $region76: #{tpu_custom_call.1} parent=11 // pred_fallthru
          _
      $region12: #{tpu_custom_call.1} parent=5 // pred_fallthru
        _
      %p524 = scmp.lt.s32.totalorder %s27, 2
      // Predicated region
      $region77: #{tpu_custom_call.1} parent=5 // pred_check
        %p525 = pneg %p524
      $region78: #{tpu_custom_call.1} parent=5 // pred_check_branch
        %527 = sbr.rel (%p525) target = $region80
      $region79: #{tpu_custom_call.1} parent=5 // pred_region
        // Predicated region
        $region81: #{tpu_custom_call.1} parent=79 // pred_check
          %p528 = pneg %p61
        $region82: #{tpu_custom_call.1} parent=79 // pred_check_branch
          %530 = sbr.rel (%p528) target = $region84
        $region83: #{tpu_custom_call.1} parent=79 // pred_region
          %p531 = scmp.lt.s32.totalorder %s34, 1
          %s532 = scalar_select %p531, %s34, 1
          %p533 = scmp.lt.s32.totalorder %s35, 1
          %s534 = scalar_select %p533, %s35, 1
          %s535 = smul.addr %s532, 2
          %s536 = sadd.s32 %s534, %s535
          %s537 = smul.addr %s536, 2
          %s538 = scalar_lea.vmem %s0, %s537
        $region84: #{tpu_custom_call.1} parent=79 // pred_fallthru
          _
        // Predicated region
        $region85: #{tpu_custom_call.1} parent=79 // pred_check
          %p539 = pneg %p91
        $region86: #{tpu_custom_call.1} parent=79 // pred_check_branch
          %541 = sbr.rel (%p539) target = $region88
        $region87: #{tpu_custom_call.1} parent=79 // pred_region
          %s542 = sadd.s32 %s35, 1
          %p543 = scmp.lt.s32.totalorder %s34, 1
          %s544 = scalar_select %p543, %s34, 1
          %p545 = scmp.lt.s32.totalorder %s542, 1
          %s546 = scalar_select %p545, %s542, 1
          %s547 = smul.addr %s544, 2
          %s548 = sadd.s32 %s546, %s547
          %s549 = smul.addr %s548, 2
          %s550 = scalar_lea.vmem %s1, %s549
          %s551 = sadd.s32 %s35, 1
        $region88: #{tpu_custom_call.1} parent=79 // pred_fallthru
          _
      $region80: #{tpu_custom_call.1} parent=5 // pred_fallthru
        _
      %p552 = scmp.le.s32.totalorder 1, %s27
      %p553 = scmp.lt.s32.totalorder %s27, 3
      %p554 = pnand %p552, %p553
      %p555 = pneg %p554
      // Predicated region
      $region89: #{tpu_custom_call.1} parent=5 // pred_check
        _
      $region90: #{tpu_custom_call.1} parent=5 // pred_check_branch
        %557 = sbr.rel (%p554) target = $region92
      $region91: #{tpu_custom_call.1} parent=5 // pred_region
        %s558 = ssub.s32 %s27, 1
        %p559 = scmp.lt.s32.totalorder %s36, 1
        %s560 = scalar_select %p559, %s36, 1
        %p561 = scmp.lt.s32.totalorder %s37, 1
        %s562 = scalar_select %p561, %s37, 1
        %s563 = smul.addr %s560, 2
        %s564 = sadd.s32 %s562, %s563
        %s565 = smul.addr %s564, 2
        %s566 = scalar_lea.vmem %s0, %s565
        %p567 = pneg %p67
        %p568 = pneg %p64
        %s569 = sadd.s32 %s37, 1
        %p570 = scmp.lt.s32.totalorder %s36, 1
        %s571 = scalar_select %p570, %s36, 1
        %p572 = scmp.lt.s32.totalorder %s569, 1
        %s573 = scalar_select %p572, %s569, 1
        %s574 = smul.addr %s571, 2
        %s575 = sadd.s32 %s573, %s574
        %s576 = smul.addr %s575, 2
        %s577 = scalar_lea.vmem %s1, %s576
        %p578 = pneg %p97
        %p579 = pneg %p94
        %p580 = pneg %p118
        %p581 = pneg %p115
        %p582 = pneg %p139
        %p583 = pneg %p136
        %p584 = pneg %p160
        %p585 = pneg %p157
        %p586 = pneg %p181
        %p587 = pneg %p178
        %p588 = pneg %p202
        %p589 = pneg %p199
        %p590 = pneg %p223
        %p591 = pneg %p220
        %p592 = pneg %p244
        %p593 = pneg %p241
        %p594 = pneg %p265
        %p595 = pneg %p262
        %p596 = pneg %p286
        %p597 = pneg %p283
        %p598 = pneg %p307
        %p599 = pneg %p304
        %p600 = pneg %p328
        %p601 = pneg %p325
        %p602 = pneg %p349
        %p603 = pneg %p346
        %p604 = pneg %p370
        %p605 = pneg %p367
        %p606 = pneg %p391
        %p607 = pneg %p388
        %p608 = pneg %p412
        %p609 = pneg %p409
        %p610 = pneg %p433
        %p611 = pneg %p430
        %p612 = pneg %p461
        %p613 = pneg %p458
        %s614 = sand.u32 %s448, 1
        %s615 = scalar_lea.sflag [#allocation4], %s614
        %s616 = sand.u32 %s448, 1
        %s617 = smul.addr %s616, 8
        %s618 = scalar_lea.vmem [#allocation3], %s617
        %p619 = scmp.lt.s32.totalorder %s36, 1
        %s620 = scalar_select %p619, %s36, 1
        %p621 = scmp.lt.s32.totalorder %s37, 1
        %s622 = scalar_select %p621, %s37, 1
        %s623 = smul.addr %s620, 2
        %s624 = sadd.s32 %s622, %s623
        %s625 = smul.addr %s624, 2
        %s626 = scalar_lea.vmem %s0, %s625
        %s627 = sadd.s32 %s37, 1
        %p628 = scmp.lt.s32.totalorder %s36, 1
        %s629 = scalar_select %p628, %s36, 1
        %p630 = scmp.lt.s32.totalorder %s627, 1
        %s631 = scalar_select %p630, %s627, 1
        %s632 = smul.addr %s629, 2
        %s633 = sadd.s32 %s631, %s632
        %s634 = smul.addr %s633, 2
        %s635 = scalar_lea.vmem %s1, %s634
        %s636 = sadd.s32 %s37, 1
        %p638 = scmp.eq.s32.totalorder %s37, 0
        %639 = vst [vmem:[#allocation2] sm:$0xff] 0
        %640 = vst [vmem:[#allocation2 + $0x18] sm:$0xff] 0
        %v641 = vld [vmem:[%s626] sm:$0x3]
        %642 = vst [vmem:[#allocation2 + $0x8] sm:$0x3] %v641
        %v643 = vld [vmem:[%s635] sm:$0x3]
        %644 = vst [vmem:[#allocation2 + $0x10] sm:$0x3] %v643
        %v645 = vld [vmem:[#allocation2] sm:$0x3]
        %v646 = vld [vmem:[#allocation2 + $0x8] sm:$0x3]
        %v647 = vld [vmem:[#allocation2 + $0x10] sm:$0x3]
        %v648 = vld [vmem:[%s2] sm:$0xf]
        %v649 = vld [vmem:[%s2 + $0x4] sm:$0xf]
        %v650 = vld [vmem:[%s2 + $0x8] sm:$0xf]
        %v651 = vld [vmem:[%s2 + $0xc] sm:$0xf]
        %v656 = vunpack.c.l.b16 %v648
        %v657 = vunpack.c.l.b16 %v649
        %v658 = vunpack.c.l.b16 %v650
        %v659 = vunpack.c.l.b16 %v651
        %v660 = vpack.c.b16 %v657, %v656
        %v661 = vpack.c.b16 %v659, %v658
        %662 = vrot.lane.b32.xlu0 %v660, 124
        %v663 = vpop.permute.xlu0 %662
        %664 = vrot.lane.b32.xlu0 %v661, 124
        %v665 = vpop.permute.xlu0 %664
        %669 = vrot.lane.b32.xlu0 %v645, 1
        %v670 = vpop.permute.xlu0 %669
        %671 = vrot.lane.b32.xlu0 %v646, 1
        %v672 = vpop.permute.xlu0 %671
        %673 = vrot.lane.b32.xlu0 %v647, 1
        %v674 = vpop.permute.xlu0 %673
        %vm675 = vcmask 7168
        %v676 = vsel %vm675, %v670, %v672
        %v677 = vsel %vm675, %v672, %v674
        %vm678 = vcmask 31744
        %v680 = vsel %vm678, %v663, 0
        %v683 = vsel %vm678, %v665, 0
        %vm685 = vcmask 1041408
        %v687 = vsel %vm685, %v676, 0
        %v690 = vsel %vm685, %v677, 0
        %692 = vmatprep.subr.bf16.mxu0 %v690
        %693 = vmatpush1.bf16.msra.mxu0 %v687
        %694 = vmatprep.subr.bf16.mxu0 0
        %695 = vmatpush1.bf16.msra.mxu0 0
        %696 = vmatprep.subr.bf16.mxu0 0
        %697 = vmatpush1.bf16.msra.mxu0 0
        %698 = vmatprep.subr.bf16.mxu0 0
        %699 = vmatpush1.bf16.msra.mxu0 0
        %700 = vmatprep.subr.bf16.mxu0 0
        %701 = vmatpush1.bf16.msra.mxu0 0
        %702 = vmatprep.subr.bf16.mxu0 0
        %703 = vmatpush1.bf16.msra.mxu0 0
        %704 = vmatprep.subr.bf16.mxu0 0
        %705 = vmatpush1.bf16.msra.mxu0 0
        %706 = vmatprep.subr.bf16.mxu0 0
        %707 = vmatpush1.bf16.msra.mxu0 0
        %708 = vmatprep.subr.bf16.mxu0 0
        %709 = vmatpush1.bf16.msra.mxu0 0
        %710 = vmatprep.subr.bf16.mxu0 0
        %711 = vmatpush1.bf16.msra.mxu0 0
        %712 = vmatprep.subr.bf16.mxu0 0
        %713 = vmatpush1.bf16.msra.mxu0 0
        %714 = vmatprep.subr.bf16.mxu0 0
        %715 = vmatpush1.bf16.msra.mxu0 0
        %716 = vmatprep.subr.bf16.mxu0 0
        %717 = vmatpush1.bf16.msra.mxu0 0
        %718 = vmatprep.subr.bf16.mxu0 0
        %719 = vmatpush1.bf16.msra.mxu0 0
        %720 = vmatprep.subr.bf16.mxu0 0
        %721 = vmatpush1.bf16.msra.mxu0 0
        %722 = vmatprep.subr.bf16.mxu0 0
        %723 = vmatpush1.bf16.msra.mxu0 0
        %724 = vmatprep.mubr.bf16.mxu0 0
        %725 = vmatmul.mubr.bf16.gmra.mrb[0].mxu0 %v680
        %v726 = vpop.f32.mrb[0].mxu0
        %v727 = vadd.f32 0.0, %v726
        %v728 = vpop.f32.mrb[0].mxu0
        %v729 = vadd.f32 0.0, %v728
        %v730 = vpop.f32.mrb[0].mxu0
        %v731 = vadd.f32 0.0, %v730
        %v732 = vpop.f32.mrb[0].mxu0
        %v733 = vadd.f32 0.0, %v732
        %734 = vmatprep.mubr.bf16.mxu0 0
        %735 = vmatmul.mubr.bf16.gmra.mrb[0].mxu0 %v683
        %v736 = vpop.f32.mrb[0].mxu0
        %v737 = vadd.f32 0.0, %v736
        %v738 = vpop.f32.mrb[0].mxu0
        %v739 = vadd.f32 0.0, %v738
        %v740 = vpop.f32.mrb[0].mxu0
        %v741 = vadd.f32 0.0, %v740
        %v742 = vpop.f32.mrb[0].mxu0
        %v743 = vadd.f32 0.0, %v742
        %744 = vdwg.mxu0
        %745 = vrot.lane.b32.xlu0 %v645, 2
        %v746 = vpop.permute.xlu0 %745
        %747 = vrot.lane.b32.xlu0 %v646, 2
        %v748 = vpop.permute.xlu0 %747
        %749 = vrot.lane.b32.xlu0 %v647, 2
        %v750 = vpop.permute.xlu0 %749
        %vm751 = vcmask 15360
        %v752 = vsel %vm751, %v746, %v748
        %v753 = vsel %vm751, %v748, %v750
        %v755 = vsel %vm678, %v660, 0
        %v758 = vsel %vm678, %v661, 0
        %v761 = vsel %vm685, %v752, 0
        %v764 = vsel %vm685, %v753, 0
        %766 = vmatprep.subr.bf16.mxu0 %v764
        %767 = vmatpush1.bf16.msra.mxu0 %v761
        %768 = vmatprep.subr.bf16.mxu0 0
        %769 = vmatpush1.bf16.msra.mxu0 0
        %770 = vmatprep.subr.bf16.mxu0 0
        %771 = vmatpush1.bf16.msra.mxu0 0
        %772 = vmatprep.subr.bf16.mxu0 0
        %773 = vmatpush1.bf16.msra.mxu0 0
        %774 = vmatprep.subr.bf16.mxu0 0
        %775 = vmatpush1.bf16.msra.mxu0 0
        %776 = vmatprep.subr.bf16.mxu0 0
        %777 = vmatpush1.bf16.msra.mxu0 0
        %778 = vmatprep.subr.bf16.mxu0 0
        %779 = vmatpush1.bf16.msra.mxu0 0
        %780 = vmatprep.subr.bf16.mxu0 0
        %781 = vmatpush1.bf16.msra.mxu0 0
        %782 = vmatprep.subr.bf16.mxu0 0
        %783 = vmatpush1.bf16.msra.mxu0 0
        %784 = vmatprep.subr.bf16.mxu0 0
        %785 = vmatpush1.bf16.msra.mxu0 0
        %786 = vmatprep.subr.bf16.mxu0 0
        %787 = vmatpush1.bf16.msra.mxu0 0
        %788 = vmatprep.subr.bf16.mxu0 0
        %789 = vmatpush1.bf16.msra.mxu0 0
        %790 = vmatprep.subr.bf16.mxu0 0
        %791 = vmatpush1.bf16.msra.mxu0 0
        %792 = vmatprep.subr.bf16.mxu0 0
        %793 = vmatpush1.bf16.msra.mxu0 0
        %794 = vmatprep.subr.bf16.mxu0 0
        %795 = vmatpush1.bf16.msra.mxu0 0
        %796 = vmatprep.subr.bf16.mxu0 0
        %797 = vmatpush1.bf16.msra.mxu0 0
        %798 = vmatprep.mubr.bf16.mxu0 0
        %799 = vmatmul.mubr.bf16.gmra.mrb[0].mxu0 %v755
        %v800 = vpop.f32.mrb[0].mxu0
        %v801 = vadd.f32 %v727, %v800
        %v802 = vpop.f32.mrb[0].mxu0
        %v803 = vadd.f32 %v729, %v802
        %v804 = vpop.f32.mrb[0].mxu0
        %v805 = vadd.f32 %v731, %v804
        %v806 = vpop.f32.mrb[0].mxu0
        %v807 = vadd.f32 %v733, %v806
        %808 = vmatprep.mubr.bf16.mxu0 0
        %809 = vmatmul.mubr.bf16.gmra.mrb[0].mxu0 %v758
        %v810 = vpop.f32.mrb[0].mxu0
        %v811 = vadd.f32 %v737, %v810
        %v812 = vpop.f32.mrb[0].mxu0
        %v813 = vadd.f32 %v739, %v812
        %v814 = vpop.f32.mrb[0].mxu0
        %v815 = vadd.f32 %v741, %v814
        %v816 = vpop.f32.mrb[0].mxu0
        %v817 = vadd.f32 %v743, %v816
        %818 = vdwg.mxu0
        %819 = vrot.lane.b32.xlu0 %v660, 120
        %v820 = vpop.permute.xlu0 %819
        %821 = vrot.lane.b32.xlu0 %v661, 120
        %v822 = vpop.permute.xlu0 %821
        %v824 = vsel %vm678, %v820, 0
        %v827 = vsel %vm678, %v822, 0
        %v830 = vsel %vm685, %v646, 0
        %v833 = vsel %vm685, %v647, 0
        %835 = vmatprep.subr.bf16.mxu0 %v833
        %836 = vmatpush1.bf16.msra.mxu0 %v830
        %837 = vmatprep.subr.bf16.mxu0 0
        %838 = vmatpush1.bf16.msra.mxu0 0
        %839 = vmatprep.subr.bf16.mxu0 0
        %840 = vmatpush1.bf16.msra.mxu0 0
        %841 = vmatprep.subr.bf16.mxu0 0
        %842 = vmatpush1.bf16.msra.mxu0 0
        %843 = vmatprep.subr.bf16.mxu0 0
        %844 = vmatpush1.bf16.msra.mxu0 0
        %845 = vmatprep.subr.bf16.mxu0 0
        %846 = vmatpush1.bf16.msra.mxu0 0
        %847 = vmatprep.subr.bf16.mxu0 0
        %848 = vmatpush1.bf16.msra.mxu0 0
        %849 = vmatprep.subr.bf16.mxu0 0
        %850 = vmatpush1.bf16.msra.mxu0 0
        %851 = vmatprep.subr.bf16.mxu0 0
        %852 = vmatpush1.bf16.msra.mxu0 0
        %853 = vmatprep.subr.bf16.mxu0 0
        %854 = vmatpush1.bf16.msra.mxu0 0
        %855 = vmatprep.subr.bf16.mxu0 0
        %856 = vmatpush1.bf16.msra.mxu0 0
        %857 = vmatprep.subr.bf16.mxu0 0
        %858 = vmatpush1.bf16.msra.mxu0 0
        %859 = vmatprep.subr.bf16.mxu0 0
        %860 = vmatpush1.bf16.msra.mxu0 0
        %861 = vmatprep.subr.bf16.mxu0 0
        %862 = vmatpush1.bf16.msra.mxu0 0
        %863 = vmatprep.subr.bf16.mxu0 0
        %864 = vmatpush1.bf16.msra.mxu0 0
        %865 = vmatprep.subr.bf16.mxu0 0
        %866 = vmatpush1.bf16.msra.mxu0 0
        %867 = vmatprep.mubr.bf16.mxu0 0
        %868 = vmatmul.mubr.bf16.gmra.mrb[0].mxu0 %v824
        %v869 = vpop.f32.mrb[0].mxu0
        %v870 = vadd.f32 0.0, %v869
        %v871 = vpop.f32.mrb[0].mxu0
        %v872 = vadd.f32 0.0, %v871
        %v873 = vpop.f32.mrb[0].mxu0
        %v874 = vadd.f32 0.0, %v873
        %v875 = vpop.f32.mrb[0].mxu0
        %v876 = vadd.f32 0.0, %v875
        %877 = vmatprep.mubr.bf16.mxu0 0
        %878 = vmatmul.mubr.bf16.gmra.mrb[0].mxu0 %v827
        %v879 = vpop.f32.mrb[0].mxu0
        %v880 = vadd.f32 0.0, %v879
        %v881 = vpop.f32.mrb[0].mxu0
        %v882 = vadd.f32 0.0, %v881
        %v883 = vpop.f32.mrb[0].mxu0
        %v884 = vadd.f32 0.0, %v883
        %v885 = vpop.f32.mrb[0].mxu0
        %v886 = vadd.f32 0.0, %v885
        %887 = vdwg.mxu0
        %v888 = vadd.f32 %v801, %v870
        %v889 = vadd.f32 %v803, %v872
        %v890 = vadd.f32 %v805, %v874
        %v891 = vadd.f32 %v807, %v876
        %v892 = vadd.f32 %v811, %v880
        %v893 = vadd.f32 %v813, %v882
        %v894 = vadd.f32 %v815, %v884
        %v895 = vadd.f32 %v817, %v886
        %v896 = vld [vmem:[%s3] sm:$0xff]
        %v897 = vld [vmem:[%s3 + $0x8] sm:$0xff]
        %v898 = vld [vmem:[%s3 + $0x10] sm:$0xff]
        %v899 = vld [vmem:[%s3 + $0x18] sm:$0xff]
        %901 = vset.pattern.permute.xlu0 0
        %902 = vperm.xlu0 %901, %v896
        %v903 = vpop.permute.xlu0 %902
        %906 = vset.pattern.permute.xlu0 0
        %907 = vperm.xlu0 %906, %v897
        %v908 = vpop.permute.xlu0 %907
        %911 = vset.pattern.permute.xlu0 0
        %912 = vperm.xlu0 %911, %v898
        %v913 = vpop.permute.xlu0 %912
        %916 = vset.pattern.permute.xlu0 0
        %917 = vperm.xlu0 %916, %v899
        %v918 = vpop.permute.xlu0 %917
        %v920 = vadd.f32 %v888, %v903
        %v921 = vadd.f32 %v889, %v903
        %v922 = vadd.f32 %v890, %v908
        %v923 = vadd.f32 %v891, %v908
        %v924 = vadd.f32 %v892, %v913
        %v925 = vadd.f32 %v893, %v913
        %v926 = vadd.f32 %v894, %v918
        %v927 = vadd.f32 %v895, %v918
        %v928 = vmax.f32 %v920, 0.0
        %v929 = vmax.f32 %v921, 0.0
        %v930 = vmax.f32 %v922, 0.0
        %v931 = vmax.f32 %v923, 0.0
        %v932 = vmax.f32 %v924, 0.0
        %v933 = vmax.f32 %v925, 0.0
        %v934 = vmax.f32 %v926, 0.0
        %v935 = vmax.f32 %v927, 0.0
        %v936 = vpack.c.bf16 %v930, %v928
        %v937 = vpack.c.bf16 %v931, %v929
        %v938 = vpack.c.bf16 %v934, %v932
        %v939 = vpack.c.bf16 %v935, %v933
        %940 = vst [vmem:[#allocation2 + $0x8] sm:$0xff] %v936
        %941 = vst [vmem:[#allocation2 + $0x10] sm:$0xff] %v937
        %942 = vst [vmem:[#allocation2 + $0x20] sm:$0xff] %v938
        %943 = vst [vmem:[#allocation2 + $0x28] sm:$0xff] %v939
        // Predicated region
        $region93: #{tpu_custom_call.1} parent=91 // pred_check
          %p944 = pneg %p638
        $region94: #{tpu_custom_call.1} parent=91 // pred_check_branch
          %946 = sbr.rel (%p944) target = $region96
        $region95: #{tpu_custom_call.1} parent=91 // pred_region
          %947 = vst [vmem:[#allocation2 + $0x8] sm:$0xff] 0
          %948 = vst [vmem:[#allocation2 + $0x20] sm:$0xff] 0
        $region96: #{tpu_custom_call.1} parent=91 // pred_fallthru
          _
        %v949 = vld [vmem:[#allocation2] sm:$0xff]
        %v950 = vld [vmem:[#allocation2 + $0x8] sm:$0xff]
        %v951 = vld [vmem:[#allocation2 + $0x10] sm:$0xff]
        %v952 = vld [vmem:[#allocation2 + $0x18] sm:$0xff]
        %v953 = vld [vmem:[#allocation2 + $0x20] sm:$0xff]
        %v954 = vld [vmem:[#allocation2 + $0x28] sm:$0xff]
        %961 = vrot.lane.b32.xlu0 %v949, 127
        %v962 = vpop.permute.xlu0 %961
        %963 = vrot.lane.b32.xlu0 %v950, 127
        %v964 = vpop.permute.xlu0 %963
        %965 = vrot.lane.b32.xlu0 %v951, 127
        %v966 = vpop.permute.xlu0 %965
        %967 = vrot.lane.b32.xlu0 %v952, 127
        %v968 = vpop.permute.xlu0 %967
        %969 = vrot.lane.b32.xlu0 %v953, 127
        %v970 = vpop.permute.xlu0 %969
        %971 = vrot.lane.b32.xlu0 %v954, 127
        %v972 = vpop.permute.xlu0 %971
        %vm973 = vcmask 1039360
        %v974 = vsel %vm973, %v962, %v964
        %v975 = vsel %vm973, %v964, %v966
        %v976 = vsel %vm973, %v968, %v970
        %v977 = vsel %vm973, %v970, %v972
        %978 = vrot.lane.b32.xlu0 %v950, 126
        %v979 = vpop.permute.xlu0 %978
        %980 = vrot.lane.b32.xlu0 %v951, 126
        %v981 = vpop.permute.xlu0 %980
        %982 = vrot.lane.b32.xlu0 %v953, 126
        %v983 = vpop.permute.xlu0 %982
        %984 = vrot.lane.b32.xlu0 %v954, 126
        %v985 = vpop.permute.xlu0 %984
        %vm986 = vcmask 1031168
        %v987 = vsel %vm986, %v979, %v981
        %v988 = vsel %vm986, %v983, %v985
        %v989 = vld [vmem:[%s4] sm:$0xf]
        %v990 = vld [vmem:[%s4 + $0x4] sm:$0xf]
        %v991 = vld [vmem:[%s4 + $0x8] sm:$0xf]
        %v992 = vld [vmem:[%s4 + $0xc] sm:$0xf]
        %v993 = vld [vmem:[%s5] sm:$0xff]
        %v994 = vld [vmem:[%s5 + $0x8] sm:$0xff]
        %v995 = vld [vmem:[%s5 + $0x10] sm:$0xff]
        %v996 = vld [vmem:[%s5 + $0x18] sm:$0xff]
        %998 = vset.pattern.permute.xlu0 0
        %999 = vperm.xlu0 %998, %v993
        %v1000 = vpop.permute.xlu0 %999
        %1003 = vset.pattern.permute.xlu0 0
        %1004 = vperm.xlu0 %1003, %v994
        %v1005 = vpop.permute.xlu0 %1004
        %1008 = vset.pattern.permute.xlu0 0
        %1009 = vperm.xlu0 %1008, %v995
        %v1010 = vpop.permute.xlu0 %1009
        %1013 = vset.pattern.permute.xlu0 0
        %1014 = vperm.xlu0 %1013, %v996
        %v1015 = vpop.permute.xlu0 %1014
        %v1021 = vunpack.c.l.b16 %v989
        %v1022 = vunpack.c.l.b16 %v990
        %v1023 = vunpack.c.l.b16 %v991
        %v1024 = vunpack.c.l.b16 %v992
        %v1025 = vpack.c.b16 %v1022, %v1021
        %v1026 = vpack.c.b16 %v1024, %v1023
        %1027 = vrot.lane.b32.xlu0 %v949, 2
        %v1028 = vpop.permute.xlu0 %1027
        %1029 = vrot.lane.b32.xlu0 %v950, 2
        %v1030 = vpop.permute.xlu0 %1029
        %1031 = vrot.lane.b32.xlu0 %v951, 2
        %v1032 = vpop.permute.xlu0 %1031
        %1033 = vrot.lane.b32.xlu0 %v952, 2
        %v1034 = vpop.permute.xlu0 %1033
        %1035 = vrot.lane.b32.xlu0 %v953, 2
        %v1036 = vpop.permute.xlu0 %1035
        %1037 = vrot.lane.b32.xlu0 %v954, 2
        %v1038 = vpop.permute.xlu0 %1037
        %1039 = vrot.lane.b32.xlu0 %v974, 2
        %v1040 = vpop.permute.xlu0 %1039
        %1041 = vrot.lane.b32.xlu0 %v975, 2
        %v1042 = vpop.permute.xlu0 %1041
        %1043 = vrot.lane.b32.xlu0 %v966, 2
        %v1044 = vpop.permute.xlu0 %1043
        %1045 = vrot.lane.b32.xlu0 %v976, 2
        %v1046 = vpop.permute.xlu0 %1045
        %1047 = vrot.lane.b32.xlu0 %v977, 2
        %v1048 = vpop.permute.xlu0 %1047
        %1049 = vrot.lane.b32.xlu0 %v972, 2
        %v1050 = vpop.permute.xlu0 %1049
        %1051 = vrot.lane.b32.xlu0 %v979, 2
        %v1052 = vpop.permute.xlu0 %1051
        %1053 = vrot.lane.b32.xlu0 %v987, 2
        %v1054 = vpop.permute.xlu0 %1053
        %1055 = vrot.lane.b32.xlu0 %v981, 2
        %v1056 = vpop.permute.xlu0 %1055
        %1057 = vrot.lane.b32.xlu0 %v983, 2
        %v1058 = vpop.permute.xlu0 %1057
        %1059 = vrot.lane.b32.xlu0 %v988, 2
        %v1060 = vpop.permute.xlu0 %1059
        %1061 = vrot.lane.b32.xlu0 %v985, 2
        %v1062 = vpop.permute.xlu0 %1061
        %v1063 = vsel %vm751, %v1028, %v1030
        %v1064 = vsel %vm751, %v1030, %v1032
        %v1065 = vsel %vm751, %v1034, %v1036
        %v1066 = vsel %vm751, %v1036, %v1038
        %v1067 = vsel %vm751, %v1040, %v1042
        %v1068 = vsel %vm751, %v1042, %v1044
        %v1069 = vsel %vm751, %v1046, %v1048
        %v1070 = vsel %vm751, %v1048, %v1050
        %v1071 = vsel %vm751, %v1052, %v1054
        %v1072 = vsel %vm751, %v1054, %v1056
        %v1073 = vsel %vm751, %v1058, %v1060
        %v1074 = vsel %vm751, %v1060, %v1062
        %vm1087 = vcmask 785408
        %v1089 = vsel %vm1087, %v1025, 0
        %v1092 = vsel %vm1087, %v1026, 0
        %1094 = vmatprep.subr.bf16.mxu0 %v1064
        %1095 = vmatpush1.bf16.msra.mxu0 %v1063
        %1096 = vmatprep.subr.bf16.mxu0 %v1066
        %1097 = vmatpush1.bf16.msra.mxu0 %v1065
        %1098 = vmatprep.subr.bf16.mxu0 %v1068
        %1099 = vmatpush1.bf16.msra.mxu0 %v1067
        %1100 = vmatprep.subr.bf16.mxu0 %v1070
        %1101 = vmatpush1.bf16.msra.mxu0 %v1069
        %1102 = vmatprep.subr.bf16.mxu0 %v1072
        %1103 = vmatpush1.bf16.msra.mxu0 %v1071
        %1104 = vmatprep.subr.bf16.mxu0 %v1074
        %1105 = vmatpush1.bf16.msra.mxu0 %v1073
        %1106 = vmatprep.subr.bf16.mxu0 0
        %1107 = vmatpush1.bf16.msra.mxu0 0
        %1108 = vmatprep.subr.bf16.mxu0 0
        %1109 = vmatpush1.bf16.msra.mxu0 0
        %1110 = vmatprep.subr.bf16.mxu0 0
        %1111 = vmatpush1.bf16.msra.mxu0 0
        %1112 = vmatprep.subr.bf16.mxu0 0
        %1113 = vmatpush1.bf16.msra.mxu0 0
        %1114 = vmatprep.subr.bf16.mxu0 0
        %1115 = vmatpush1.bf16.msra.mxu0 0
        %1116 = vmatprep.subr.bf16.mxu0 0
        %1117 = vmatpush1.bf16.msra.mxu0 0
        %1118 = vmatprep.subr.bf16.mxu0 0
        %1119 = vmatpush1.bf16.msra.mxu0 0
        %1120 = vmatprep.subr.bf16.mxu0 0
        %1121 = vmatpush1.bf16.msra.mxu0 0
        %1122 = vmatprep.subr.bf16.mxu0 0
        %1123 = vmatpush1.bf16.msra.mxu0 0
        %1124 = vmatprep.subr.bf16.mxu0 0
        %1125 = vmatpush1.bf16.msra.mxu0 0
        %1126 = vmatprep.mubr.bf16.mxu0 0
        %1127 = vmatmul.mubr.bf16.gmra.mrb[0].mxu0 %v1089
        %v1128 = vpop.f32.mrb[0].mxu0
        %v1129 = vadd.f32 %v1000, %v1128
        %v1130 = vpop.f32.mrb[0].mxu0
        %v1131 = vadd.f32 %v1000, %v1130
        %v1132 = vpop.f32.mrb[0].mxu0
        %v1133 = vadd.f32 %v1005, %v1132
        %v1134 = vpop.f32.mrb[0].mxu0
        %v1135 = vadd.f32 %v1005, %v1134
        %1136 = vmatprep.mubr.bf16.mxu0 0
        %1137 = vmatmul.mubr.bf16.gmra.mrb[0].mxu0 %v1092
        %v1138 = vpop.f32.mrb[0].mxu0
        %v1139 = vadd.f32 %v1010, %v1138
        %v1140 = vpop.f32.mrb[0].mxu0
        %v1141 = vadd.f32 %v1010, %v1140
        %v1142 = vpop.f32.mrb[0].mxu0
        %v1143 = vadd.f32 %v1015, %v1142
        %v1144 = vpop.f32.mrb[0].mxu0
        %v1145 = vadd.f32 %v1015, %v1144
        %1146 = vdwg.mxu0
        %v1147 = vmax.f32 %v1129, 0.0
        %v1148 = vmax.f32 %v1131, 0.0
        %v1149 = vmax.f32 %v1133, 0.0
        %v1150 = vmax.f32 %v1135, 0.0
        %v1151 = vmax.f32 %v1139, 0.0
        %v1152 = vmax.f32 %v1141, 0.0
        %v1153 = vmax.f32 %v1143, 0.0
        %v1154 = vmax.f32 %v1145, 0.0
        %v1155 = vunpack.c.l.bf16 %v950
        %v1156 = vunpack.c.l.bf16 %v951
        %v1157 = vunpack.c.h.bf16 %v950
        %v1158 = vunpack.c.h.bf16 %v951
        %v1159 = vunpack.c.l.bf16 %v953
        %v1160 = vunpack.c.l.bf16 %v954
        %v1161 = vunpack.c.h.bf16 %v953
        %v1162 = vunpack.c.h.bf16 %v954
        %v1163 = vadd.f32 %v1147, %v1155
        %v1164 = vadd.f32 %v1148, %v1156
        %v1165 = vadd.f32 %v1149, %v1157
        %v1166 = vadd.f32 %v1150, %v1158
        %v1167 = vadd.f32 %v1151, %v1159
        %v1168 = vadd.f32 %v1152, %v1160
        %v1169 = vadd.f32 %v1153, %v1161
        %v1170 = vadd.f32 %v1154, %v1162
        %v1171 = vpack.c.bf16 %v1165, %v1163
        %v1172 = vpack.c.bf16 %v1166, %v1164
        %v1173 = vpack.c.bf16 %v1169, %v1167
        %v1174 = vpack.c.bf16 %v1170, %v1168
        %1175 = vst [vmem:[#allocation2 + $0x8] sm:$0xff] %v1171
        %1176 = vst [vmem:[#allocation2 + $0x10] sm:$0xff] %v1172
        %1177 = vst [vmem:[#allocation2 + $0x20] sm:$0xff] %v1173
        %1178 = vst [vmem:[#allocation2 + $0x28] sm:$0xff] %v1174
        // Predicated region
        $region97: #{tpu_custom_call.1} parent=91 // pred_check
          %p1179 = pneg %p638
        $region98: #{tpu_custom_call.1} parent=91 // pred_check_branch
          %1181 = sbr.rel (%p1179) target = $region100
        $region99: #{tpu_custom_call.1} parent=91 // pred_region
          %1182 = vst [vmem:[#allocation2 + $0x8] sm:$0xff] 0
          %1183 = vst [vmem:[#allocation2 + $0x20] sm:$0xff] 0
        $region100: #{tpu_custom_call.1} parent=91 // pred_fallthru
          _
        %v1184 = vld [vmem:[#allocation2] sm:$0xff]
        %v1185 = vld [vmem:[#allocation2 + $0x8] sm:$0xff]
        %v1186 = vld [vmem:[#allocation2 + $0x10] sm:$0xff]
        %v1187 = vld [vmem:[#allocation2 + $0x18] sm:$0xff]
        %v1188 = vld [vmem:[#allocation2 + $0x20] sm:$0xff]
        %v1189 = vld [vmem:[#allocation2 + $0x28] sm:$0xff]
        %1196 = vrot.lane.b32.xlu0 %v1184, 125
        %v1197 = vpop.permute.xlu0 %1196
        %1198 = vrot.lane.b32.xlu0 %v1185, 125
        %v1199 = vpop.permute.xlu0 %1198
        %1200 = vrot.lane.b32.xlu0 %v1186, 125
        %v1201 = vpop.permute.xlu0 %1200
        %1202 = vrot.lane.b32.xlu0 %v1187, 125
        %v1203 = vpop.permute.xlu0 %1202
        %1204 = vrot.lane.b32.xlu0 %v1188, 125
        %v1205 = vpop.permute.xlu0 %1204
        %1206 = vrot.lane.b32.xlu0 %v1189, 125
        %v1207 = vpop.permute.xlu0 %1206
        %vm1208 = vcmask 1022976
        %v1209 = vsel %vm1208, %v1197, %v1199
        %v1210 = vsel %vm1208, %v1199, %v1201
        %v1211 = vsel %vm1208, %v1203, %v1205
        %v1212 = vsel %vm1208, %v1205, %v1207
        %1213 = vrot.lane.b32.xlu0 %v1185, 122
        %v1214 = vpop.permute.xlu0 %1213
        %1215 = vrot.lane.b32.xlu0 %v1186, 122
        %v1216 = vpop.permute.xlu0 %1215
        %1217 = vrot.lane.b32.xlu0 %v1188, 122
        %v1218 = vpop.permute.xlu0 %1217
        %1219 = vrot.lane.b32.xlu0 %v1189, 122
        %v1220 = vpop.permute.xlu0 %1219
        %vm1221 = vcmask 998400
        %v1222 = vsel %vm1221, %v1214, %v1216
        %v1223 = vsel %vm1221, %v1218, %v1220
        %v1224 = vld [vmem:[%s6] sm:$0xf]
        %v1225 = vld [vmem:[%s6 + $0x4] sm:$0xf]
        %v1226 = vld [vmem:[%s6 + $0x8] sm:$0xf]
        %v1227 = vld [vmem:[%s6 + $0xc] sm:$0xf]
        %v1228 = vld [vmem:[%s7] sm:$0xff]
        %v1229 = vld [vmem:[%s7 + $0x8] sm:$0xff]
        %v1230 = vld [vmem:[%s7 + $0x10] sm:$0xff]
        %v1231 = vld [vmem:[%s7 + $0x18] sm:$0xff]
        %1233 = vset.pattern.permute.xlu0 0
        %1234 = vperm.xlu0 %1233, %v1228
        %v1235 = vpop.permute.xlu0 %1234
        %1238 = vset.pattern.permute.xlu0 0
        %1239 = vperm.xlu0 %1238, %v1229
        %v1240 = vpop.permute.xlu0 %1239
        %1243 = vset.pattern.permute.xlu0 0
        %1244 = vperm.xlu0 %1243, %v1230
        %v1245 = vpop.permute.xlu0 %1244
        %1248 = vset.pattern.permute.xlu0 0
        %1249 = vperm.xlu0 %1248, %v1231
        %v1250 = vpop.permute.xlu0 %1249
        %v1256 = vunpack.c.l.b16 %v1224
        %v1257 = vunpack.c.l.b16 %v1225
        %v1258 = vunpack.c.l.b16 %v1226
        %v1259 = vunpack.c.l.b16 %v1227
        %v1260 = vpack.c.b16 %v1257, %v1256
        %v1261 = vpack.c.b16 %v1259, %v1258
        %1262 = vrot.lane.b32.xlu0 %v1184, 6
        %v1263 = vpop.permute.xlu0 %1262
        %1264 = vrot.lane.b32.xlu0 %v1185, 6
        %v1265 = vpop.permute.xlu0 %1264
        %1266 = vrot.lane.b32.xlu0 %v1186, 6
        %v1267 = vpop.permute.xlu0 %1266
        %1268 = vrot.lane.b32.xlu0 %v1187, 6
        %v1269 = vpop.permute.xlu0 %1268
        %1270 = vrot.lane.b32.xlu0 %v1188, 6
        %v1271 = vpop.permute.xlu0 %1270
        %1272 = vrot.lane.b32.xlu0 %v1189, 6
        %v1273 = vpop.permute.xlu0 %1272
        %1274 = vrot.lane.b32.xlu0 %v1209, 6
        %v1275 = vpop.permute.xlu0 %1274
        %1276 = vrot.lane.b32.xlu0 %v1210, 6
        %v1277 = vpop.permute.xlu0 %1276
        %1278 = vrot.lane.b32.xlu0 %v1201, 6
        %v1279 = vpop.permute.xlu0 %1278
        %1280 = vrot.lane.b32.xlu0 %v1211, 6
        %v1281 = vpop.permute.xlu0 %1280
        %1282 = vrot.lane.b32.xlu0 %v1212, 6
        %v1283 = vpop.permute.xlu0 %1282
        %1284 = vrot.lane.b32.xlu0 %v1207, 6
        %v1285 = vpop.permute.xlu0 %1284
        %1286 = vrot.lane.b32.xlu0 %v1214, 6
        %v1287 = vpop.permute.xlu0 %1286
        %1288 = vrot.lane.b32.xlu0 %v1222, 6
        %v1289 = vpop.permute.xlu0 %1288
        %1290 = vrot.lane.b32.xlu0 %v1216, 6
        %v1291 = vpop.permute.xlu0 %1290
        %1292 = vrot.lane.b32.xlu0 %v1218, 6
        %v1293 = vpop.permute.xlu0 %1292
        %1294 = vrot.lane.b32.xlu0 %v1223, 6
        %v1295 = vpop.permute.xlu0 %1294
        %1296 = vrot.lane.b32.xlu0 %v1220, 6
        %v1297 = vpop.permute.xlu0 %1296
        %vm1298 = vcmask 48128
        %v1299 = vsel %vm1298, %v1263, %v1265
        %v1300 = vsel %vm1298, %v1265, %v1267
        %v1301 = vsel %vm1298, %v1269, %v1271
        %v1302 = vsel %vm1298, %v1271, %v1273
        %v1303 = vsel %vm1298, %v1275, %v1277
        %v1304 = vsel %vm1298, %v1277, %v1279
        %v1305 = vsel %vm1298, %v1281, %v1283
        %v1306 = vsel %vm1298, %v1283, %v1285
        %v1307 = vsel %vm1298, %v1287, %v1289
        %v1308 = vsel %vm1298, %v1289, %v1291
        %v1309 = vsel %vm1298, %v1293, %v1295
        %v1310 = vsel %vm1298, %v1295, %v1297
        %v1324 = vsel %vm1087, %v1260, 0
        %v1327 = vsel %vm1087, %v1261, 0
        %1329 = vmatprep.subr.bf16.mxu0 %v1300
        %1330 = vmatpush1.bf16.msra.mxu0 %v1299
        %1331 = vmatprep.subr.bf16.mxu0 %v1302
        %1332 = vmatpush1.bf16.msra.mxu0 %v1301
        %1333 = vmatprep.subr.bf16.mxu0 %v1304
        %1334 = vmatpush1.bf16.msra.mxu0 %v1303
        %1335 = vmatprep.subr.bf16.mxu0 %v1306
        %1336 = vmatpush1.bf16.msra.mxu0 %v1305
        %1337 = vmatprep.subr.bf16.mxu0 %v1308
        %1338 = vmatpush1.bf16.msra.mxu0 %v1307
        %1339 = vmatprep.subr.bf16.mxu0 %v1310
        %1340 = vmatpush1.bf16.msra.mxu0 %v1309
        %1341 = vmatprep.subr.bf16.mxu0 0
        %1342 = vmatpush1.bf16.msra.mxu0 0
        %1343 = vmatprep.subr.bf16.mxu0 0
        %1344 = vmatpush1.bf16.msra.mxu0 0
        %1345 = vmatprep.subr.bf16.mxu0 0
        %1346 = vmatpush1.bf16.msra.mxu0 0
        %1347 = vmatprep.subr.bf16.mxu0 0
        %1348 = vmatpush1.bf16.msra.mxu0 0
        %1349 = vmatprep.subr.bf16.mxu0 0
        %1350 = vmatpush1.bf16.msra.mxu0 0
        %1351 = vmatprep.subr.bf16.mxu0 0
        %1352 = vmatpush1.bf16.msra.mxu0 0
        %1353 = vmatprep.subr.bf16.mxu0 0
        %1354 = vmatpush1.bf16.msra.mxu0 0
        %1355 = vmatprep.subr.bf16.mxu0 0
        %1356 = vmatpush1.bf16.msra.mxu0 0
        %1357 = vmatprep.subr.bf16.mxu0 0
        %1358 = vmatpush1.bf16.msra.mxu0 0
        %1359 = vmatprep.subr.bf16.mxu0 0
        %1360 = vmatpush1.bf16.msra.mxu0 0
        %1361 = vmatprep.mubr.bf16.mxu0 0
        %1362 = vmatmul.mubr.bf16.gmra.mrb[0].mxu0 %v1324
        %v1363 = vpop.f32.mrb[0].mxu0
        %v1364 = vadd.f32 %v1235, %v1363
        %v1365 = vpop.f32.mrb[0].mxu0
        %v1366 = vadd.f32 %v1235, %v1365
        %v1367 = vpop.f32.mrb[0].mxu0
        %v1368 = vadd.f32 %v1240, %v1367
        %v1369 = vpop.f32.mrb[0].mxu0
        %v1370 = vadd.f32 %v1240, %v1369
        %1371 = vmatprep.mubr.bf16.mxu0 0
        %1372 = vmatmul.mubr.bf16.gmra.mrb[0].mxu0 %v1327
        %v1373 = vpop.f32.mrb[0].mxu0
        %v1374 = vadd.f32 %v1245, %v1373
        %v1375 = vpop.f32.mrb[0].mxu0
        %v1376 = vadd.f32 %v1245, %v1375
        %v1377 = vpop.f32.mrb[0].mxu0
        %v1378 = vadd.f32 %v1250, %v1377
        %v1379 = vpop.f32.mrb[0].mxu0
        %v1380 = vadd.f32 %v1250, %v1379
        %1381 = vdwg.mxu0
        %v1382 = vmax.f32 %v1364, 0.0
        %v1383 = vmax.f32 %v1366, 0.0
        %v1384 = vmax.f32 %v1368, 0.0
        %v1385 = vmax.f32 %v1370, 0.0
        %v1386 = vmax.f32 %v1374, 0.0
        %v1387 = vmax.f32 %v1376, 0.0
        %v1388 = vmax.f32 %v1378, 0.0
        %v1389 = vmax.f32 %v1380, 0.0
        %v1390 = vunpack.c.l.bf16 %v1185
        %v1391 = vunpack.c.l.bf16 %v1186
        %v1392 = vunpack.c.h.bf16 %v1185
        %v1393 = vunpack.c.h.bf16 %v1186
        %v1394 = vunpack.c.l.bf16 %v1188
        %v1395 = vunpack.c.l.bf16 %v1189
        %v1396 = vunpack.c.h.bf16 %v1188
        %v1397 = vunpack.c.h.bf16 %v1189
        %v1398 = vadd.f32 %v1382, %v1390
        %v1399 = vadd.f32 %v1383, %v1391
        %v1400 = vadd.f32 %v1384, %v1392
        %v1401 = vadd.f32 %v1385, %v1393
        %v1402 = vadd.f32 %v1386, %v1394
        %v1403 = vadd.f32 %v1387, %v1395
        %v1404 = vadd.f32 %v1388, %v1396
        %v1405 = vadd.f32 %v1389, %v1397
        %v1406 = vpack.c.bf16 %v1400, %v1398
        %v1407 = vpack.c.bf16 %v1401, %v1399
        %v1408 = vpack.c.bf16 %v1404, %v1402
        %v1409 = vpack.c.bf16 %v1405, %v1403
        %1410 = vst [vmem:[#allocation2 + $0x8] sm:$0xff] %v1406
        %1411 = vst [vmem:[#allocation2 + $0x10] sm:$0xff] %v1407
        %1412 = vst [vmem:[#allocation2 + $0x20] sm:$0xff] %v1408
        %1413 = vst [vmem:[#allocation2 + $0x28] sm:$0xff] %v1409
        // Predicated region
        $region101: #{tpu_custom_call.1} parent=91 // pred_check
          %p1414 = pneg %p638
        $region102: #{tpu_custom_call.1} parent=91 // pred_check_branch
          %1416 = sbr.rel (%p1414) target = $region104
        $region103: #{tpu_custom_call.1} parent=91 // pred_region
          %1417 = vst [vmem:[#allocation2 + $0x8] sm:$0xff] 0
          %1418 = vst [vmem:[#allocation2 + $0x20] sm:$0xff] 0
        $region104: #{tpu_custom_call.1} parent=91 // pred_fallthru
          _
        %v1419 = vld [vmem:[#allocation2] sm:$0xff]
        %v1420 = vld [vmem:[#allocation2 + $0x8] sm:$0xff]
        %v1421 = vld [vmem:[#allocation2 + $0x10] sm:$0xff]
        %v1422 = vld [vmem:[#allocation2 + $0x18] sm:$0xff]
        %v1423 = vld [vmem:[#allocation2 + $0x20] sm:$0xff]
        %v1424 = vld [vmem:[#allocation2 + $0x28] sm:$0xff]
        %1431 = vrot.lane.b32.xlu0 %v1419, 119
        %v1432 = vpop.permute.xlu0 %1431
        %1433 = vrot.lane.b32.xlu0 %v1420, 119
        %v1434 = vpop.permute.xlu0 %1433
        %1435 = vrot.lane.b32.xlu0 %v1421, 119
        %v1436 = vpop.permute.xlu0 %1435
        %1437 = vrot.lane.b32.xlu0 %v1422, 119
        %v1438 = vpop.permute.xlu0 %1437
        %1439 = vrot.lane.b32.xlu0 %v1423, 119
        %v1440 = vpop.permute.xlu0 %1439
        %1441 = vrot.lane.b32.xlu0 %v1424, 119
        %v1442 = vpop.permute.xlu0 %1441
        %vm1443 = vcmask 973824
        %v1444 = vsel %vm1443, %v1432, %v1434
        %v1445 = vsel %vm1443, %v1434, %v1436
        %v1446 = vsel %vm1443, %v1438, %v1440
        %v1447 = vsel %vm1443, %v1440, %v1442
        %1448 = vrot.lane.b32.xlu0 %v1420, 110
        %v1449 = vpop.permute.xlu0 %1448
        %1450 = vrot.lane.b32.xlu0 %v1421, 110
        %v1451 = vpop.permute.xlu0 %1450
        %1452 = vrot.lane.b32.xlu0 %v1423, 110
        %v1453 = vpop.permute.xlu0 %1452
        %1454 = vrot.lane.b32.xlu0 %v1424, 110
        %v1455 = vpop.permute.xlu0 %1454
        %vm1456 = vcmask 900096
        %v1457 = vsel %vm1456, %v1449, %v1451
        %v1458 = vsel %vm1456, %v1453, %v1455
        %v1459 = vld [vmem:[%s8] sm:$0xf]
        %v1460 = vld [vmem:[%s8 + $0x4] sm:$0xf]
        %v1461 = vld [vmem:[%s8 + $0x8] sm:$0xf]
        %v1462 = vld [vmem:[%s8 + $0xc] sm:$0xf]
        %v1463 = vld [vmem:[%s9] sm:$0xff]
        %v1464 = vld [vmem:[%s9 + $0x8] sm:$0xff]
        %v1465 = vld [vmem:[%s9 + $0x10] sm:$0xff]
        %v1466 = vld [vmem:[%s9 + $0x18] sm:$0xff]
        %1468 = vset.pattern.permute.xlu0 0
        %1469 = vperm.xlu0 %1468, %v1463
        %v1470 = vpop.permute.xlu0 %1469
        %1473 = vset.pattern.permute.xlu0 0
        %1474 = vperm.xlu0 %1473, %v1464
        %v1475 = vpop.permute.xlu0 %1474
        %1478 = vset.pattern.permute.xlu0 0
        %1479 = vperm.xlu0 %1478, %v1465
        %v1480 = vpop.permute.xlu0 %1479
        %1483 = vset.pattern.permute.xlu0 0
        %1484 = vperm.xlu0 %1483, %v1466
        %v1485 = vpop.permute.xlu0 %1484
        %v1491 = vunpack.c.l.b16 %v1459
        %v1492 = vunpack.c.l.b16 %v1460
        %v1493 = vunpack.c.l.b16 %v1461
        %v1494 = vunpack.c.l.b16 %v1462
        %v1495 = vpack.c.b16 %v1492, %v1491
        %v1496 = vpack.c.b16 %v1494, %v1493
        %1497 = vrot.lane.b32.xlu0 %v1419, 18
        %v1498 = vpop.permute.xlu0 %1497
        %1499 = vrot.lane.b32.xlu0 %v1420, 18
        %v1500 = vpop.permute.xlu0 %1499
        %1501 = vrot.lane.b32.xlu0 %v1421, 18
        %v1502 = vpop.permute.xlu0 %1501
        %1503 = vrot.lane.b32.xlu0 %v1422, 18
        %v1504 = vpop.permute.xlu0 %1503
        %1505 = vrot.lane.b32.xlu0 %v1423, 18
        %v1506 = vpop.permute.xlu0 %1505
        %1507 = vrot.lane.b32.xlu0 %v1424, 18
        %v1508 = vpop.permute.xlu0 %1507
        %1509 = vrot.lane.b32.xlu0 %v1444, 18
        %v1510 = vpop.permute.xlu0 %1509
        %1511 = vrot.lane.b32.xlu0 %v1445, 18
        %v1512 = vpop.permute.xlu0 %1511
        %1513 = vrot.lane.b32.xlu0 %v1436, 18
        %v1514 = vpop.permute.xlu0 %1513
        %1515 = vrot.lane.b32.xlu0 %v1446, 18
        %v1516 = vpop.permute.xlu0 %1515
        %1517 = vrot.lane.b32.xlu0 %v1447, 18
        %v1518 = vpop.permute.xlu0 %1517
        %1519 = vrot.lane.b32.xlu0 %v1442, 18
        %v1520 = vpop.permute.xlu0 %1519
        %1521 = vrot.lane.b32.xlu0 %v1449, 18
        %v1522 = vpop.permute.xlu0 %1521
        %1523 = vrot.lane.b32.xlu0 %v1457, 18
        %v1524 = vpop.permute.xlu0 %1523
        %1525 = vrot.lane.b32.xlu0 %v1451, 18
        %v1526 = vpop.permute.xlu0 %1525
        %1527 = vrot.lane.b32.xlu0 %v1453, 18
        %v1528 = vpop.permute.xlu0 %1527
        %1529 = vrot.lane.b32.xlu0 %v1458, 18
        %v1530 = vpop.permute.xlu0 %1529
        %1531 = vrot.lane.b32.xlu0 %v1455, 18
        %v1532 = vpop.permute.xlu0 %1531
        %vm1533 = vcmask 146432
        %v1534 = vsel %vm1533, %v1498, %v1500
        %v1535 = vsel %vm1533, %v1500, %v1502
        %v1536 = vsel %vm1533, %v1504, %v1506
        %v1537 = vsel %vm1533, %v1506, %v1508
        %v1538 = vsel %vm1533, %v1510, %v1512
        %v1539 = vsel %vm1533, %v1512, %v1514
        %v1540 = vsel %vm1533, %v1516, %v1518
        %v1541 = vsel %vm1533, %v1518, %v1520
        %v1542 = vsel %vm1533, %v1522, %v1524
        %v1543 = vsel %vm1533, %v1524, %v1526
        %v1544 = vsel %vm1533, %v1528, %v1530
        %v1545 = vsel %vm1533, %v1530, %v1532
        %v1559 = vsel %vm1087, %v1495, 0
        %v1562 = vsel %vm1087, %v1496, 0
        %1564 = vmatprep.subr.bf16.mxu0 %v1535
        %1565 = vmatpush1.bf16.msra.mxu0 %v1534
        %1566 = vmatprep.subr.bf16.mxu0 %v1537
        %1567 = vmatpush1.bf16.msra.mxu0 %v1536
        %1568 = vmatprep.subr.bf16.mxu0 %v1539
        %1569 = vmatpush1.bf16.msra.mxu0 %v1538
        %1570 = vmatprep.subr.bf16.mxu0 %v1541
        %1571 = vmatpush1.bf16.msra.mxu0 %v1540
        %1572 = vmatprep.subr.bf16.mxu0 %v1543
        %1573 = vmatpush1.bf16.msra.mxu0 %v1542
        %1574 = vmatprep.subr.bf16.mxu0 %v1545
        %1575 = vmatpush1.bf16.msra.mxu0 %v1544
        %1576 = vmatprep.subr.bf16.mxu0 0
        %1577 = vmatpush1.bf16.msra.mxu0 0
        %1578 = vmatprep.subr.bf16.mxu0 0
        %1579 = vmatpush1.bf16.msra.mxu0 0
        %1580 = vmatprep.subr.bf16.mxu0 0
        %1581 = vmatpush1.bf16.msra.mxu0 0
        %1582 = vmatprep.subr.bf16.mxu0 0
        %1583 = vmatpush1.bf16.msra.mxu0 0
        %1584 = vmatprep.subr.bf16.mxu0 0
        %1585 = vmatpush1.bf16.msra.mxu0 0
        %1586 = vmatprep.subr.bf16.mxu0 0
        %1587 = vmatpush1.bf16.msra.mxu0 0
        %1588 = vmatprep.subr.bf16.mxu0 0
        %1589 = vmatpush1.bf16.msra.mxu0 0
        %1590 = vmatprep.subr.bf16.mxu0 0
        %1591 = vmatpush1.bf16.msra.mxu0 0
        %1592 = vmatprep.subr.bf16.mxu0 0
        %1593 = vmatpush1.bf16.msra.mxu0 0
        %1594 = vmatprep.subr.bf16.mxu0 0
        %1595 = vmatpush1.bf16.msra.mxu0 0
        %1596 = vmatprep.mubr.bf16.mxu0 0
        %1597 = vmatmul.mubr.bf16.gmra.mrb[0].mxu0 %v1559
        %v1598 = vpop.f32.mrb[0].mxu0
        %v1599 = vadd.f32 %v1470, %v1598
        %v1600 = vpop.f32.mrb[0].mxu0
        %v1601 = vadd.f32 %v1470, %v1600
        %v1602 = vpop.f32.mrb[0].mxu0
        %v1603 = vadd.f32 %v1475, %v1602
        %v1604 = vpop.f32.mrb[0].mxu0
        %v1605 = vadd.f32 %v1475, %v1604
        %1606 = vmatprep.mubr.bf16.mxu0 0
        %1607 = vmatmul.mubr.bf16.gmra.mrb[0].mxu0 %v1562
        %v1608 = vpop.f32.mrb[0].mxu0
        %v1609 = vadd.f32 %v1480, %v1608
        %v1610 = vpop.f32.mrb[0].mxu0
        %v1611 = vadd.f32 %v1480, %v1610
        %v1612 = vpop.f32.mrb[0].mxu0
        %v1613 = vadd.f32 %v1485, %v1612
        %v1614 = vpop.f32.mrb[0].mxu0
        %v1615 = vadd.f32 %v1485, %v1614
        %1616 = vdwg.mxu0
        %v1617 = vmax.f32 %v1599, 0.0
        %v1618 = vmax.f32 %v1601, 0.0
        %v1619 = vmax.f32 %v1603, 0.0
        %v1620 = vmax.f32 %v1605, 0.0
        %v1621 = vmax.f32 %v1609, 0.0
        %v1622 = vmax.f32 %v1611, 0.0
        %v1623 = vmax.f32 %v1613, 0.0
        %v1624 = vmax.f32 %v1615, 0.0
        %v1625 = vunpack.c.l.bf16 %v1420
        %v1626 = vunpack.c.l.bf16 %v1421
        %v1627 = vunpack.c.h.bf16 %v1420
        %v1628 = vunpack.c.h.bf16 %v1421
        %v1629 = vunpack.c.l.bf16 %v1423
        %v1630 = vunpack.c.l.bf16 %v1424
        %v1631 = vunpack.c.h.bf16 %v1423
        %v1632 = vunpack.c.h.bf16 %v1424
        %v1633 = vadd.f32 %v1617, %v1625
        %v1634 = vadd.f32 %v1618, %v1626
        %v1635 = vadd.f32 %v1619, %v1627
        %v1636 = vadd.f32 %v1620, %v1628
        %v1637 = vadd.f32 %v1621, %v1629
        %v1638 = vadd.f32 %v1622, %v1630
        %v1639 = vadd.f32 %v1623, %v1631
        %v1640 = vadd.f32 %v1624, %v1632
        %v1641 = vpack.c.bf16 %v1635, %v1633
        %v1642 = vpack.c.bf16 %v1636, %v1634
        %v1643 = vpack.c.bf16 %v1639, %v1637
        %v1644 = vpack.c.bf16 %v1640, %v1638
        %1645 = vst [vmem:[#allocation2 + $0x8] sm:$0xff] %v1641
        %1646 = vst [vmem:[#allocation2 + $0x10] sm:$0xff] %v1642
        %1647 = vst [vmem:[#allocation2 + $0x20] sm:$0xff] %v1643
        %1648 = vst [vmem:[#allocation2 + $0x28] sm:$0xff] %v1644
        // Predicated region
        $region105: #{tpu_custom_call.1} parent=91 // pred_check
          %p1649 = pneg %p638
        $region106: #{tpu_custom_call.1} parent=91 // pred_check_branch
          %1651 = sbr.rel (%p1649) target = $region108
        $region107: #{tpu_custom_call.1} parent=91 // pred_region
          %1652 = vst [vmem:[#allocation2 + $0x8] sm:$0xff] 0
          %1653 = vst [vmem:[#allocation2 + $0x20] sm:$0xff] 0
        $region108: #{tpu_custom_call.1} parent=91 // pred_fallthru
          _
        %v1654 = vld [vmem:[#allocation2] sm:$0xff]
        %v1655 = vld [vmem:[#allocation2 + $0x8] sm:$0xff]
        %v1656 = vld [vmem:[#allocation2 + $0x10] sm:$0xff]
        %v1657 = vld [vmem:[#allocation2 + $0x18] sm:$0xff]
        %v1658 = vld [vmem:[#allocation2 + $0x20] sm:$0xff]
        %v1659 = vld [vmem:[#allocation2 + $0x28] sm:$0xff]
        %1666 = vrot.lane.b32.xlu0 %v1654, 127
        %v1667 = vpop.permute.xlu0 %1666
        %1668 = vrot.lane.b32.xlu0 %v1655, 127
        %v1669 = vpop.permute.xlu0 %1668
        %1670 = vrot.lane.b32.xlu0 %v1656, 127
        %v1671 = vpop.permute.xlu0 %1670
        %1672 = vrot.lane.b32.xlu0 %v1657, 127
        %v1673 = vpop.permute.xlu0 %1672
        %1674 = vrot.lane.b32.xlu0 %v1658, 127
        %v1675 = vpop.permute.xlu0 %1674
        %1676 = vrot.lane.b32.xlu0 %v1659, 127
        %v1677 = vpop.permute.xlu0 %1676
        %v1678 = vsel %vm973, %v1667, %v1669
        %v1679 = vsel %vm973, %v1669, %v1671
        %v1680 = vsel %vm973, %v1673, %v1675
        %v1681 = vsel %vm973, %v1675, %v1677
        %1682 = vrot.lane.b32.xlu0 %v1655, 126
        %v1683 = vpop.permute.xlu0 %1682
        %1684 = vrot.lane.b32.xlu0 %v1656, 126
        %v1685 = vpop.permute.xlu0 %1684
        %1686 = vrot.lane.b32.xlu0 %v1658, 126
        %v1687 = vpop.permute.xlu0 %1686
        %1688 = vrot.lane.b32.xlu0 %v1659, 126
        %v1689 = vpop.permute.xlu0 %1688
        %v1690 = vsel %vm986, %v1683, %v1685
        %v1691 = vsel %vm986, %v1687, %v1689
        %v1692 = vld [vmem:[%s10] sm:$0xf]
        %v1693 = vld [vmem:[%s10 + $0x4] sm:$0xf]
        %v1694 = vld [vmem:[%s10 + $0x8] sm:$0xf]
        %v1695 = vld [vmem:[%s10 + $0xc] sm:$0xf]
        %v1696 = vld [vmem:[%s11] sm:$0xff]
        %v1697 = vld [vmem:[%s11 + $0x8] sm:$0xff]
        %v1698 = vld [vmem:[%s11 + $0x10] sm:$0xff]
        %v1699 = vld [vmem:[%s11 + $0x18] sm:$0xff]
        %1701 = vset.pattern.permute.xlu0 0
        %1702 = vperm.xlu0 %1701, %v1696
        %v1703 = vpop.permute.xlu0 %1702
        %1706 = vset.pattern.permute.xlu0 0
        %1707 = vperm.xlu0 %1706, %v1697
        %v1708 = vpop.permute.xlu0 %1707
        %1711 = vset.pattern.permute.xlu0 0
        %1712 = vperm.xlu0 %1711, %v1698
        %v1713 = vpop.permute.xlu0 %1712
        %1716 = vset.pattern.permute.xlu0 0
        %1717 = vperm.xlu0 %1716, %v1699
        %v1718 = vpop.permute.xlu0 %1717
        %v1724 = vunpack.c.l.b16 %v1692
        %v1725 = vunpack.c.l.b16 %v1693
        %v1726 = vunpack.c.l.b16 %v1694
        %v1727 = vunpack.c.l.b16 %v1695
        %v1728 = vpack.c.b16 %v1725, %v1724
        %v1729 = vpack.c.b16 %v1727, %v1726
        %1730 = vrot.lane.b32.xlu0 %v1654, 2
        %v1731 = vpop.permute.xlu0 %1730
        %1732 = vrot.lane.b32.xlu0 %v1655, 2
        %v1733 = vpop.permute.xlu0 %1732
        %1734 = vrot.lane.b32.xlu0 %v1656, 2
        %v1735 = vpop.permute.xlu0 %1734
        %1736 = vrot.lane.b32.xlu0 %v1657, 2
        %v1737 = vpop.permute.xlu0 %1736
        %1738 = vrot.lane.b32.xlu0 %v1658, 2
        %v1739 = vpop.permute.xlu0 %1738
        %1740 = vrot.lane.b32.xlu0 %v1659, 2
        %v1741 = vpop.permute.xlu0 %1740
        %1742 = vrot.lane.b32.xlu0 %v1678, 2
        %v1743 = vpop.permute.xlu0 %1742
        %1744 = vrot.lane.b32.xlu0 %v1679, 2
        %v1745 = vpop.permute.xlu0 %1744
        %1746 = vrot.lane.b32.xlu0 %v1671, 2
        %v1747 = vpop.permute.xlu0 %1746
        %1748 = vrot.lane.b32.xlu0 %v1680, 2
        %v1749 = vpop.permute.xlu0 %1748
        %1750 = vrot.lane.b32.xlu0 %v1681, 2
        %v1751 = vpop.permute.xlu0 %1750
        %1752 = vrot.lane.b32.xlu0 %v1677, 2
        %v1753 = vpop.permute.xlu0 %1752
        %1754 = vrot.lane.b32.xlu0 %v1683, 2
        %v1755 = vpop.permute.xlu0 %1754
        %1756 = vrot.lane.b32.xlu0 %v1690, 2
        %v1757 = vpop.permute.xlu0 %1756
        %1758 = vrot.lane.b32.xlu0 %v1685, 2
        %v1759 = vpop.permute.xlu0 %1758
        %1760 = vrot.lane.b32.xlu0 %v1687, 2
        %v1761 = vpop.permute.xlu0 %1760
        %1762 = vrot.lane.b32.xlu0 %v1691, 2
        %v1763 = vpop.permute.xlu0 %1762
        %1764 = vrot.lane.b32.xlu0 %v1689, 2
        %v1765 = vpop.permute.xlu0 %1764
        %v1766 = vsel %vm751, %v1731, %v1733
        %v1767 = vsel %vm751, %v1733, %v1735
        %v1768 = vsel %vm751, %v1737, %v1739
        %v1769 = vsel %vm751, %v1739, %v1741
        %v1770 = vsel %vm751, %v1743, %v1745
        %v1771 = vsel %vm751, %v1745, %v1747
        %v1772 = vsel %vm751, %v1749, %v1751
        %v1773 = vsel %vm751, %v1751, %v1753
        %v1774 = vsel %vm751, %v1755, %v1757
        %v1775 = vsel %vm751, %v1757, %v1759
        %v1776 = vsel %vm751, %v1761, %v1763
        %v1777 = vsel %vm751, %v1763, %v1765
        %v1791 = vsel %vm1087, %v1728, 0
        %v1794 = vsel %vm1087, %v1729, 0
        %1796 = vmatprep.subr.bf16.mxu0 %v1767
        %1797 = vmatpush1.bf16.msra.mxu0 %v1766
        %1798 = vmatprep.subr.bf16.mxu0 %v1769
        %1799 = vmatpush1.bf16.msra.mxu0 %v1768
        %1800 = vmatprep.subr.bf16.mxu0 %v1771
        %1801 = vmatpush1.bf16.msra.mxu0 %v1770
        %1802 = vmatprep.subr.bf16.mxu0 %v1773
        %1803 = vmatpush1.bf16.msra.mxu0 %v1772
        %1804 = vmatprep.subr.bf16.mxu0 %v1775
        %1805 = vmatpush1.bf16.msra.mxu0 %v1774
        %1806 = vmatprep.subr.bf16.mxu0 %v1777
        %1807 = vmatpush1.bf16.msra.mxu0 %v1776
        %1808 = vmatprep.subr.bf16.mxu0 0
        %1809 = vmatpush1.bf16.msra.mxu0 0
        %1810 = vmatprep.subr.bf16.mxu0 0
        %1811 = vmatpush1.bf16.msra.mxu0 0
        %1812 = vmatprep.subr.bf16.mxu0 0
        %1813 = vmatpush1.bf16.msra.mxu0 0
        %1814 = vmatprep.subr.bf16.mxu0 0
        %1815 = vmatpush1.bf16.msra.mxu0 0
        %1816 = vmatprep.subr.bf16.mxu0 0
        %1817 = vmatpush1.bf16.msra.mxu0 0
        %1818 = vmatprep.subr.bf16.mxu0 0
        %1819 = vmatpush1.bf16.msra.mxu0 0
        %1820 = vmatprep.subr.bf16.mxu0 0
        %1821 = vmatpush1.bf16.msra.mxu0 0
        %1822 = vmatprep.subr.bf16.mxu0 0
        %1823 = vmatpush1.bf16.msra.mxu0 0
        %1824 = vmatprep.subr.bf16.mxu0 0
        %1825 = vmatpush1.bf16.msra.mxu0 0
        %1826 = vmatprep.subr.bf16.mxu0 0
        %1827 = vmatpush1.bf16.msra.mxu0 0
        %1828 = vmatprep.mubr.bf16.mxu0 0
        %1829 = vmatmul.mubr.bf16.gmra.mrb[0].mxu0 %v1791
        %v1830 = vpop.f32.mrb[0].mxu0
        %v1831 = vadd.f32 %v1703, %v1830
        %v1832 = vpop.f32.mrb[0].mxu0
        %v1833 = vadd.f32 %v1703, %v1832
        %v1834 = vpop.f32.mrb[0].mxu0
        %v1835 = vadd.f32 %v1708, %v1834
        %v1836 = vpop.f32.mrb[0].mxu0
        %v1837 = vadd.f32 %v1708, %v1836
        %1838 = vmatprep.mubr.bf16.mxu0 0
        %1839 = vmatmul.mubr.bf16.gmra.mrb[0].mxu0 %v1794
        %v1840 = vpop.f32.mrb[0].mxu0
        %v1841 = vadd.f32 %v1713, %v1840
        %v1842 = vpop.f32.mrb[0].mxu0
        %v1843 = vadd.f32 %v1713, %v1842
        %v1844 = vpop.f32.mrb[0].mxu0
        %v1845 = vadd.f32 %v1718, %v1844
        %v1846 = vpop.f32.mrb[0].mxu0
        %v1847 = vadd.f32 %v1718, %v1846
        %1848 = vdwg.mxu0
        %v1849 = vmax.f32 %v1831, 0.0
        %v1850 = vmax.f32 %v1833, 0.0
        %v1851 = vmax.f32 %v1835, 0.0
        %v1852 = vmax.f32 %v1837, 0.0
        %v1853 = vmax.f32 %v1841, 0.0
        %v1854 = vmax.f32 %v1843, 0.0
        %v1855 = vmax.f32 %v1845, 0.0
        %v1856 = vmax.f32 %v1847, 0.0
        %v1857 = vunpack.c.l.bf16 %v1655
        %v1858 = vunpack.c.l.bf16 %v1656
        %v1859 = vunpack.c.h.bf16 %v1655
        %v1860 = vunpack.c.h.bf16 %v1656
        %v1861 = vunpack.c.l.bf16 %v1658
        %v1862 = vunpack.c.l.bf16 %v1659
        %v1863 = vunpack.c.h.bf16 %v1658
        %v1864 = vunpack.c.h.bf16 %v1659
        %v1865 = vadd.f32 %v1849, %v1857
        %v1866 = vadd.f32 %v1850, %v1858
        %v1867 = vadd.f32 %v1851, %v1859
        %v1868 = vadd.f32 %v1852, %v1860
        %v1869 = vadd.f32 %v1853, %v1861
        %v1870 = vadd.f32 %v1854, %v1862
        %v1871 = vadd.f32 %v1855, %v1863
        %v1872 = vadd.f32 %v1856, %v1864
        %v1873 = vpack.c.bf16 %v1867, %v1865
        %v1874 = vpack.c.bf16 %v1868, %v1866
        %v1875 = vpack.c.bf16 %v1871, %v1869
        %v1876 = vpack.c.bf16 %v1872, %v1870
        %1877 = vst [vmem:[#allocation2 + $0x8] sm:$0xff] %v1873
        %1878 = vst [vmem:[#allocation2 + $0x10] sm:$0xff] %v1874
        %1879 = vst [vmem:[#allocation2 + $0x20] sm:$0xff] %v1875
        %1880 = vst [vmem:[#allocation2 + $0x28] sm:$0xff] %v1876
        // Predicated region
        $region109: #{tpu_custom_call.1} parent=91 // pred_check
          %p1881 = pneg %p638
        $region110: #{tpu_custom_call.1} parent=91 // pred_check_branch
          %1883 = sbr.rel (%p1881) target = $region112
        $region111: #{tpu_custom_call.1} parent=91 // pred_region
          %1884 = vst [vmem:[#allocation2 + $0x8] sm:$0xff] 0
          %1885 = vst [vmem:[#allocation2 + $0x20] sm:$0xff] 0
        $region112: #{tpu_custom_call.1} parent=91 // pred_fallthru
          _
        %v1886 = vld [vmem:[#allocation2] sm:$0xff]
        %v1887 = vld [vmem:[#allocation2 + $0x8] sm:$0xff]
        %v1888 = vld [vmem:[#allocation2 + $0x10] sm:$0xff]
        %v1889 = vld [vmem:[#allocation2 + $0x18] sm:$0xff]
        %v1890 = vld [vmem:[#allocation2 + $0x20] sm:$0xff]
        %v1891 = vld [vmem:[#allocation2 + $0x28] sm:$0xff]
        %1898 = vrot.lane.b32.xlu0 %v1886, 125
        %v1899 = vpop.permute.xlu0 %1898
        %1900 = vrot.lane.b32.xlu0 %v1887, 125
        %v1901 = vpop.permute.xlu0 %1900
        %1902 = vrot.lane.b32.xlu0 %v1888, 125
        %v1903 = vpop.permute.xlu0 %1902
        %1904 = vrot.lane.b32.xlu0 %v1889, 125
        %v1905 = vpop.permute.xlu0 %1904
        %1906 = vrot.lane.b32.xlu0 %v1890, 125
        %v1907 = vpop.permute.xlu0 %1906
        %1908 = vrot.lane.b32.xlu0 %v1891, 125
        %v1909 = vpop.permute.xlu0 %1908
        %v1910 = vsel %vm1208, %v1899, %v1901
        %v1911 = vsel %vm1208, %v1901, %v1903
        %v1912 = vsel %vm1208, %v1905, %v1907
        %v1913 = vsel %vm1208, %v1907, %v1909
        %1914 = vrot.lane.b32.xlu0 %v1887, 122
        %v1915 = vpop.permute.xlu0 %1914
        %1916 = vrot.lane.b32.xlu0 %v1888, 122
        %v1917 = vpop.permute.xlu0 %1916
        %1918 = vrot.lane.b32.xlu0 %v1890, 122
        %v1919 = vpop.permute.xlu0 %1918
        %1920 = vrot.lane.b32.xlu0 %v1891, 122
        %v1921 = vpop.permute.xlu0 %1920
        %v1922 = vsel %vm1221, %v1915, %v1917
        %v1923 = vsel %vm1221, %v1919, %v1921
        %v1924 = vld [vmem:[%s12] sm:$0xf]
        %v1925 = vld [vmem:[%s12 + $0x4] sm:$0xf]
        %v1926 = vld [vmem:[%s12 + $0x8] sm:$0xf]
        %v1927 = vld [vmem:[%s12 + $0xc] sm:$0xf]
        %v1928 = vld [vmem:[%s13] sm:$0xff]
        %v1929 = vld [vmem:[%s13 + $0x8] sm:$0xff]
        %v1930 = vld [vmem:[%s13 + $0x10] sm:$0xff]
        %v1931 = vld [vmem:[%s13 + $0x18] sm:$0xff]
        %1933 = vset.pattern.permute.xlu0 0
        %1934 = vperm.xlu0 %1933, %v1928
        %v1935 = vpop.permute.xlu0 %1934
        %1938 = vset.pattern.permute.xlu0 0
        %1939 = vperm.xlu0 %1938, %v1929
        %v1940 = vpop.permute.xlu0 %1939
        %1943 = vset.pattern.permute.xlu0 0
        %1944 = vperm.xlu0 %1943, %v1930
        %v1945 = vpop.permute.xlu0 %1944
        %1948 = vset.pattern.permute.xlu0 0
        %1949 = vperm.xlu0 %1948, %v1931
        %v1950 = vpop.permute.xlu0 %1949
        %v1956 = vunpack.c.l.b16 %v1924
        %v1957 = vunpack.c.l.b16 %v1925
        %v1958 = vunpack.c.l.b16 %v1926
        %v1959 = vunpack.c.l.b16 %v1927
        %v1960 = vpack.c.b16 %v1957, %v1956
        %v1961 = vpack.c.b16 %v1959, %v1958
        %1962 = vrot.lane.b32.xlu0 %v1886, 6
        %v1963 = vpop.permute.xlu0 %1962
        %1964 = vrot.lane.b32.xlu0 %v1887, 6
        %v1965 = vpop.permute.xlu0 %1964
        %1966 = vrot.lane.b32.xlu0 %v1888, 6
        %v1967 = vpop.permute.xlu0 %1966
        %1968 = vrot.lane.b32.xlu0 %v1889, 6
        %v1969 = vpop.permute.xlu0 %1968
        %1970 = vrot.lane.b32.xlu0 %v1890, 6
        %v1971 = vpop.permute.xlu0 %1970
        %1972 = vrot.lane.b32.xlu0 %v1891, 6
        %v1973 = vpop.permute.xlu0 %1972
        %1974 = vrot.lane.b32.xlu0 %v1910, 6
        %v1975 = vpop.permute.xlu0 %1974
        %1976 = vrot.lane.b32.xlu0 %v1911, 6
        %v1977 = vpop.permute.xlu0 %1976
        %1978 = vrot.lane.b32.xlu0 %v1903, 6
        %v1979 = vpop.permute.xlu0 %1978
        %1980 = vrot.lane.b32.xlu0 %v1912, 6
        %v1981 = vpop.permute.xlu0 %1980
        %1982 = vrot.lane.b32.xlu0 %v1913, 6
        %v1983 = vpop.permute.xlu0 %1982
        %1984 = vrot.lane.b32.xlu0 %v1909, 6
        %v1985 = vpop.permute.xlu0 %1984
        %1986 = vrot.lane.b32.xlu0 %v1915, 6
        %v1987 = vpop.permute.xlu0 %1986
        %1988 = vrot.lane.b32.xlu0 %v1922, 6
        %v1989 = vpop.permute.xlu0 %1988
        %1990 = vrot.lane.b32.xlu0 %v1917, 6
        %v1991 = vpop.permute.xlu0 %1990
        %1992 = vrot.lane.b32.xlu0 %v1919, 6
        %v1993 = vpop.permute.xlu0 %1992
        %1994 = vrot.lane.b32.xlu0 %v1923, 6
        %v1995 = vpop.permute.xlu0 %1994
        %1996 = vrot.lane.b32.xlu0 %v1921, 6
        %v1997 = vpop.permute.xlu0 %1996
        %v1998 = vsel %vm1298, %v1963, %v1965
        %v1999 = vsel %vm1298, %v1965, %v1967
        %v2000 = vsel %vm1298, %v1969, %v1971
        %v2001 = vsel %vm1298, %v1971, %v1973
        %v2002 = vsel %vm1298, %v1975, %v1977
        %v2003 = vsel %vm1298, %v1977, %v1979
        %v2004 = vsel %vm1298, %v1981, %v1983
        %v2005 = vsel %vm1298, %v1983, %v1985
        %v2006 = vsel %vm1298, %v1987, %v1989
        %v2007 = vsel %vm1298, %v1989, %v1991
        %v2008 = vsel %vm1298, %v1993, %v1995
        %v2009 = vsel %vm1298, %v1995, %v1997
        %v2023 = vsel %vm1087, %v1960, 0
        %v2026 = vsel %vm1087, %v1961, 0
        %2028 = vmatprep.subr.bf16.mxu0 %v1999
        %2029 = vmatpush1.bf16.msra.mxu0 %v1998
        %2030 = vmatprep.subr.bf16.mxu0 %v2001
        %2031 = vmatpush1.bf16.msra.mxu0 %v2000
        %2032 = vmatprep.subr.bf16.mxu0 %v2003
        %2033 = vmatpush1.bf16.msra.mxu0 %v2002
        %2034 = vmatprep.subr.bf16.mxu0 %v2005
        %2035 = vmatpush1.bf16.msra.mxu0 %v2004
        %2036 = vmatprep.subr.bf16.mxu0 %v2007
        %2037 = vmatpush1.bf16.msra.mxu0 %v2006
        %2038 = vmatprep.subr.bf16.mxu0 %v2009
        %2039 = vmatpush1.bf16.msra.mxu0 %v2008
        %2040 = vmatprep.subr.bf16.mxu0 0
        %2041 = vmatpush1.bf16.msra.mxu0 0
        %2042 = vmatprep.subr.bf16.mxu0 0
        %2043 = vmatpush1.bf16.msra.mxu0 0
        %2044 = vmatprep.subr.bf16.mxu0 0
        %2045 = vmatpush1.bf16.msra.mxu0 0
        %2046 = vmatprep.subr.bf16.mxu0 0
        %2047 = vmatpush1.bf16.msra.mxu0 0
        %2048 = vmatprep.subr.bf16.mxu0 0
        %2049 = vmatpush1.bf16.msra.mxu0 0
        %2050 = vmatprep.subr.bf16.mxu0 0
        %2051 = vmatpush1.bf16.msra.mxu0 0
        %2052 = vmatprep.subr.bf16.mxu0 0
        %2053 = vmatpush1.bf16.msra.mxu0 0
        %2054 = vmatprep.subr.bf16.mxu0 0
        %2055 = vmatpush1.bf16.msra.mxu0 0
        %2056 = vmatprep.subr.bf16.mxu0 0
        %2057 = vmatpush1.bf16.msra.mxu0 0
        %2058 = vmatprep.subr.bf16.mxu0 0
        %2059 = vmatpush1.bf16.msra.mxu0 0
        %2060 = vmatprep.mubr.bf16.mxu0 0
        %2061 = vmatmul.mubr.bf16.gmra.mrb[0].mxu0 %v2023
        %v2062 = vpop.f32.mrb[0].mxu0
        %v2063 = vadd.f32 %v1935, %v2062
        %v2064 = vpop.f32.mrb[0].mxu0
        %v2065 = vadd.f32 %v1935, %v2064
        %v2066 = vpop.f32.mrb[0].mxu0
        %v2067 = vadd.f32 %v1940, %v2066
        %v2068 = vpop.f32.mrb[0].mxu0
        %v2069 = vadd.f32 %v1940, %v2068
        %2070 = vmatprep.mubr.bf16.mxu0 0
        %2071 = vmatmul.mubr.bf16.gmra.mrb[0].mxu0 %v2026
        %v2072 = vpop.f32.mrb[0].mxu0
        %v2073 = vadd.f32 %v1945, %v2072
        %v2074 = vpop.f32.mrb[0].mxu0
        %v2075 = vadd.f32 %v1945, %v2074
        %v2076 = vpop.f32.mrb[0].mxu0
        %v2077 = vadd.f32 %v1950, %v2076
        %v2078 = vpop.f32.mrb[0].mxu0
        %v2079 = vadd.f32 %v1950, %v2078
        %2080 = vdwg.mxu0
        %v2081 = vmax.f32 %v2063, 0.0
        %v2082 = vmax.f32 %v2065, 0.0
        %v2083 = vmax.f32 %v2067, 0.0
        %v2084 = vmax.f32 %v2069, 0.0
        %v2085 = vmax.f32 %v2073, 0.0
        %v2086 = vmax.f32 %v2075, 0.0
        %v2087 = vmax.f32 %v2077, 0.0
        %v2088 = vmax.f32 %v2079, 0.0
        %v2089 = vunpack.c.l.bf16 %v1887
        %v2090 = vunpack.c.l.bf16 %v1888
        %v2091 = vunpack.c.h.bf16 %v1887
        %v2092 = vunpack.c.h.bf16 %v1888
        %v2093 = vunpack.c.l.bf16 %v1890
        %v2094 = vunpack.c.l.bf16 %v1891
        %v2095 = vunpack.c.h.bf16 %v1890
        %v2096 = vunpack.c.h.bf16 %v1891
        %v2097 = vadd.f32 %v2081, %v2089
        %v2098 = vadd.f32 %v2082, %v2090
        %v2099 = vadd.f32 %v2083, %v2091
        %v2100 = vadd.f32 %v2084, %v2092
        %v2101 = vadd.f32 %v2085, %v2093
        %v2102 = vadd.f32 %v2086, %v2094
        %v2103 = vadd.f32 %v2087, %v2095
        %v2104 = vadd.f32 %v2088, %v2096
        %v2105 = vpack.c.bf16 %v2099, %v2097
        %v2106 = vpack.c.bf16 %v2100, %v2098
        %v2107 = vpack.c.bf16 %v2103, %v2101
        %v2108 = vpack.c.bf16 %v2104, %v2102
        %2109 = vst [vmem:[#allocation2 + $0x8] sm:$0xff] %v2105
        %2110 = vst [vmem:[#allocation2 + $0x10] sm:$0xff] %v2106
        %2111 = vst [vmem:[#allocation2 + $0x20] sm:$0xff] %v2107
        %2112 = vst [vmem:[#allocation2 + $0x28] sm:$0xff] %v2108
        // Predicated region
        $region113: #{tpu_custom_call.1} parent=91 // pred_check
          %p2113 = pneg %p638
        $region114: #{tpu_custom_call.1} parent=91 // pred_check_branch
          %2115 = sbr.rel (%p2113) target = $region116
        $region115: #{tpu_custom_call.1} parent=91 // pred_region
          %2116 = vst [vmem:[#allocation2 + $0x8] sm:$0xff] 0
          %2117 = vst [vmem:[#allocation2 + $0x20] sm:$0xff] 0
        $region116: #{tpu_custom_call.1} parent=91 // pred_fallthru
          _
        %v2118 = vld [vmem:[#allocation2] sm:$0xff]
        %v2119 = vld [vmem:[#allocation2 + $0x8] sm:$0xff]
        %v2120 = vld [vmem:[#allocation2 + $0x10] sm:$0xff]
        %v2121 = vld [vmem:[#allocation2 + $0x18] sm:$0xff]
        %v2122 = vld [vmem:[#allocation2 + $0x20] sm:$0xff]
        %v2123 = vld [vmem:[#allocation2 + $0x28] sm:$0xff]
        %2130 = vrot.lane.b32.xlu0 %v2118, 119
        %v2131 = vpop.permute.xlu0 %2130
        %2132 = vrot.lane.b32.xlu0 %v2119, 119
        %v2133 = vpop.permute.xlu0 %2132
        %2134 = vrot.lane.b32.xlu0 %v2120, 119
        %v2135 = vpop.permute.xlu0 %2134
        %2136 = vrot.lane.b32.xlu0 %v2121, 119
        %v2137 = vpop.permute.xlu0 %2136
        %2138 = vrot.lane.b32.xlu0 %v2122, 119
        %v2139 = vpop.permute.xlu0 %2138
        %2140 = vrot.lane.b32.xlu0 %v2123, 119
        %v2141 = vpop.permute.xlu0 %2140
        %v2142 = vsel %vm1443, %v2131, %v2133
        %v2143 = vsel %vm1443, %v2133, %v2135
        %v2144 = vsel %vm1443, %v2137, %v2139
        %v2145 = vsel %vm1443, %v2139, %v2141
        %2146 = vrot.lane.b32.xlu0 %v2119, 110
        %v2147 = vpop.permute.xlu0 %2146
        %2148 = vrot.lane.b32.xlu0 %v2120, 110
        %v2149 = vpop.permute.xlu0 %2148
        %2150 = vrot.lane.b32.xlu0 %v2122, 110
        %v2151 = vpop.permute.xlu0 %2150
        %2152 = vrot.lane.b32.xlu0 %v2123, 110
        %v2153 = vpop.permute.xlu0 %2152
        %v2154 = vsel %vm1456, %v2147, %v2149
        %v2155 = vsel %vm1456, %v2151, %v2153
        %v2156 = vld [vmem:[%s14] sm:$0xf]
        %v2157 = vld [vmem:[%s14 + $0x4] sm:$0xf]
        %v2158 = vld [vmem:[%s14 + $0x8] sm:$0xf]
        %v2159 = vld [vmem:[%s14 + $0xc] sm:$0xf]
        %v2160 = vld [vmem:[%s15] sm:$0xff]
        %v2161 = vld [vmem:[%s15 + $0x8] sm:$0xff]
        %v2162 = vld [vmem:[%s15 + $0x10] sm:$0xff]
        %v2163 = vld [vmem:[%s15 + $0x18] sm:$0xff]
        %2165 = vset.pattern.permute.xlu0 0
        %2166 = vperm.xlu0 %2165, %v2160
        %v2167 = vpop.permute.xlu0 %2166
        %2170 = vset.pattern.permute.xlu0 0
        %2171 = vperm.xlu0 %2170, %v2161
        %v2172 = vpop.permute.xlu0 %2171
        %2175 = vset.pattern.permute.xlu0 0
        %2176 = vperm.xlu0 %2175, %v2162
        %v2177 = vpop.permute.xlu0 %2176
        %2180 = vset.pattern.permute.xlu0 0
        %2181 = vperm.xlu0 %2180, %v2163
        %v2182 = vpop.permute.xlu0 %2181
        %v2188 = vunpack.c.l.b16 %v2156
        %v2189 = vunpack.c.l.b16 %v2157
        %v2190 = vunpack.c.l.b16 %v2158
        %v2191 = vunpack.c.l.b16 %v2159
        %v2192 = vpack.c.b16 %v2189, %v2188
        %v2193 = vpack.c.b16 %v2191, %v2190
        %2194 = vrot.lane.b32.xlu0 %v2118, 18
        %v2195 = vpop.permute.xlu0 %2194
        %2196 = vrot.lane.b32.xlu0 %v2119, 18
        %v2197 = vpop.permute.xlu0 %2196
        %2198 = vrot.lane.b32.xlu0 %v2120, 18
        %v2199 = vpop.permute.xlu0 %2198
        %2200 = vrot.lane.b32.xlu0 %v2121, 18
        %v2201 = vpop.permute.xlu0 %2200
        %2202 = vrot.lane.b32.xlu0 %v2122, 18
        %v2203 = vpop.permute.xlu0 %2202
        %2204 = vrot.lane.b32.xlu0 %v2123, 18
        %v2205 = vpop.permute.xlu0 %2204
        %2206 = vrot.lane.b32.xlu0 %v2142, 18
        %v2207 = vpop.permute.xlu0 %2206
        %2208 = vrot.lane.b32.xlu0 %v2143, 18
        %v2209 = vpop.permute.xlu0 %2208
        %2210 = vrot.lane.b32.xlu0 %v2135, 18
        %v2211 = vpop.permute.xlu0 %2210
        %2212 = vrot.lane.b32.xlu0 %v2144, 18
        %v2213 = vpop.permute.xlu0 %2212
        %2214 = vrot.lane.b32.xlu0 %v2145, 18
        %v2215 = vpop.permute.xlu0 %2214
        %2216 = vrot.lane.b32.xlu0 %v2141, 18
        %v2217 = vpop.permute.xlu0 %2216
        %2218 = vrot.lane.b32.xlu0 %v2147, 18
        %v2219 = vpop.permute.xlu0 %2218
        %2220 = vrot.lane.b32.xlu0 %v2154, 18
        %v2221 = vpop.permute.xlu0 %2220
        %2222 = vrot.lane.b32.xlu0 %v2149, 18
        %v2223 = vpop.permute.xlu0 %2222
        %2224 = vrot.lane.b32.xlu0 %v2151, 18
        %v2225 = vpop.permute.xlu0 %2224
        %2226 = vrot.lane.b32.xlu0 %v2155, 18
        %v2227 = vpop.permute.xlu0 %2226
        %2228 = vrot.lane.b32.xlu0 %v2153, 18
        %v2229 = vpop.permute.xlu0 %2228
        %v2230 = vsel %vm1533, %v2195, %v2197
        %v2231 = vsel %vm1533, %v2197, %v2199
        %v2232 = vsel %vm1533, %v2201, %v2203
        %v2233 = vsel %vm1533, %v2203, %v2205
        %v2234 = vsel %vm1533, %v2207, %v2209
        %v2235 = vsel %vm1533, %v2209, %v2211
        %v2236 = vsel %vm1533, %v2213, %v2215
        %v2237 = vsel %vm1533, %v2215, %v2217
        %v2238 = vsel %vm1533, %v2219, %v2221
        %v2239 = vsel %vm1533, %v2221, %v2223
        %v2240 = vsel %vm1533, %v2225, %v2227
        %v2241 = vsel %vm1533, %v2227, %v2229
        %v2255 = vsel %vm1087, %v2192, 0
        %v2258 = vsel %vm1087, %v2193, 0
        %2260 = vmatprep.subr.bf16.mxu0 %v2231
        %2261 = vmatpush1.bf16.msra.mxu0 %v2230
        %2262 = vmatprep.subr.bf16.mxu0 %v2233
        %2263 = vmatpush1.bf16.msra.mxu0 %v2232
        %2264 = vmatprep.subr.bf16.mxu0 %v2235
        %2265 = vmatpush1.bf16.msra.mxu0 %v2234
        %2266 = vmatprep.subr.bf16.mxu0 %v2237
        %2267 = vmatpush1.bf16.msra.mxu0 %v2236
        %2268 = vmatprep.subr.bf16.mxu0 %v2239
        %2269 = vmatpush1.bf16.msra.mxu0 %v2238
        %2270 = vmatprep.subr.bf16.mxu0 %v2241
        %2271 = vmatpush1.bf16.msra.mxu0 %v2240
        %2272 = vmatprep.subr.bf16.mxu0 0
        %2273 = vmatpush1.bf16.msra.mxu0 0
        %2274 = vmatprep.subr.bf16.mxu0 0
        %2275 = vmatpush1.bf16.msra.mxu0 0
        %2276 = vmatprep.subr.bf16.mxu0 0
        %2277 = vmatpush1.bf16.msra.mxu0 0
        %2278 = vmatprep.subr.bf16.mxu0 0
        %2279 = vmatpush1.bf16.msra.mxu0 0
        %2280 = vmatprep.subr.bf16.mxu0 0
        %2281 = vmatpush1.bf16.msra.mxu0 0
        %2282 = vmatprep.subr.bf16.mxu0 0
        %2283 = vmatpush1.bf16.msra.mxu0 0
        %2284 = vmatprep.subr.bf16.mxu0 0
        %2285 = vmatpush1.bf16.msra.mxu0 0
        %2286 = vmatprep.subr.bf16.mxu0 0
        %2287 = vmatpush1.bf16.msra.mxu0 0
        %2288 = vmatprep.subr.bf16.mxu0 0
        %2289 = vmatpush1.bf16.msra.mxu0 0
        %2290 = vmatprep.subr.bf16.mxu0 0
        %2291 = vmatpush1.bf16.msra.mxu0 0
        %2292 = vmatprep.mubr.bf16.mxu0 0
        %2293 = vmatmul.mubr.bf16.gmra.mrb[0].mxu0 %v2255
        %v2294 = vpop.f32.mrb[0].mxu0
        %v2295 = vadd.f32 %v2167, %v2294
        %v2296 = vpop.f32.mrb[0].mxu0
        %v2297 = vadd.f32 %v2167, %v2296
        %v2298 = vpop.f32.mrb[0].mxu0
        %v2299 = vadd.f32 %v2172, %v2298
        %v2300 = vpop.f32.mrb[0].mxu0
        %v2301 = vadd.f32 %v2172, %v2300
        %2302 = vmatprep.mubr.bf16.mxu0 0
        %2303 = vmatmul.mubr.bf16.gmra.mrb[0].mxu0 %v2258
        %v2304 = vpop.f32.mrb[0].mxu0
        %v2305 = vadd.f32 %v2177, %v2304
        %v2306 = vpop.f32.mrb[0].mxu0
        %v2307 = vadd.f32 %v2177, %v2306
        %v2308 = vpop.f32.mrb[0].mxu0
        %v2309 = vadd.f32 %v2182, %v2308
        %v2310 = vpop.f32.mrb[0].mxu0
        %v2311 = vadd.f32 %v2182, %v2310
        %2312 = vdwg.mxu0
        %v2313 = vmax.f32 %v2295, 0.0
        %v2314 = vmax.f32 %v2297, 0.0
        %v2315 = vmax.f32 %v2299, 0.0
        %v2316 = vmax.f32 %v2301, 0.0
        %v2317 = vmax.f32 %v2305, 0.0
        %v2318 = vmax.f32 %v2307, 0.0
        %v2319 = vmax.f32 %v2309, 0.0
        %v2320 = vmax.f32 %v2311, 0.0
        %v2321 = vunpack.c.l.bf16 %v2119
        %v2322 = vunpack.c.l.bf16 %v2120
        %v2323 = vunpack.c.h.bf16 %v2119
        %v2324 = vunpack.c.h.bf16 %v2120
        %v2325 = vunpack.c.l.bf16 %v2122
        %v2326 = vunpack.c.l.bf16 %v2123
        %v2327 = vunpack.c.h.bf16 %v2122
        %v2328 = vunpack.c.h.bf16 %v2123
        %v2329 = vadd.f32 %v2313, %v2321
        %v2330 = vadd.f32 %v2314, %v2322
        %v2331 = vadd.f32 %v2315, %v2323
        %v2332 = vadd.f32 %v2316, %v2324
        %v2333 = vadd.f32 %v2317, %v2325
        %v2334 = vadd.f32 %v2318, %v2326
        %v2335 = vadd.f32 %v2319, %v2327
        %v2336 = vadd.f32 %v2320, %v2328
        %v2337 = vpack.c.bf16 %v2331, %v2329
        %v2338 = vpack.c.bf16 %v2332, %v2330
        %v2339 = vpack.c.bf16 %v2335, %v2333
        %v2340 = vpack.c.bf16 %v2336, %v2334
        %2341 = vst [vmem:[#allocation2 + $0x8] sm:$0xff] %v2337
        %2342 = vst [vmem:[#allocation2 + $0x10] sm:$0xff] %v2338
        %2343 = vst [vmem:[#allocation2 + $0x20] sm:$0xff] %v2339
        %2344 = vst [vmem:[#allocation2 + $0x28] sm:$0xff] %v2340
        // Predicated region
        $region117: #{tpu_custom_call.1} parent=91 // pred_check
          %p2345 = pneg %p638
        $region118: #{tpu_custom_call.1} parent=91 // pred_check_branch
          %2347 = sbr.rel (%p2345) target = $region120
        $region119: #{tpu_custom_call.1} parent=91 // pred_region
          %2348 = vst [vmem:[#allocation2 + $0x8] sm:$0xff] 0
          %2349 = vst [vmem:[#allocation2 + $0x20] sm:$0xff] 0
        $region120: #{tpu_custom_call.1} parent=91 // pred_fallthru
          _
        %v2350 = vld [vmem:[#allocation2] sm:$0xff]
        %v2351 = vld [vmem:[#allocation2 + $0x8] sm:$0xff]
        %v2352 = vld [vmem:[#allocation2 + $0x10] sm:$0xff]
        %v2353 = vld [vmem:[#allocation2 + $0x18] sm:$0xff]
        %v2354 = vld [vmem:[#allocation2 + $0x20] sm:$0xff]
        %v2355 = vld [vmem:[#allocation2 + $0x28] sm:$0xff]
        %2362 = vrot.lane.b32.xlu0 %v2350, 127
        %v2363 = vpop.permute.xlu0 %2362
        %2364 = vrot.lane.b32.xlu0 %v2351, 127
        %v2365 = vpop.permute.xlu0 %2364
        %2366 = vrot.lane.b32.xlu0 %v2352, 127
        %v2367 = vpop.permute.xlu0 %2366
        %2368 = vrot.lane.b32.xlu0 %v2353, 127
        %v2369 = vpop.permute.xlu0 %2368
        %2370 = vrot.lane.b32.xlu0 %v2354, 127
        %v2371 = vpop.permute.xlu0 %2370
        %2372 = vrot.lane.b32.xlu0 %v2355, 127
        %v2373 = vpop.permute.xlu0 %2372
        %v2374 = vsel %vm973, %v2363, %v2365
        %v2375 = vsel %vm973, %v2365, %v2367
        %v2376 = vsel %vm973, %v2369, %v2371
        %v2377 = vsel %vm973, %v2371, %v2373
        %2378 = vrot.lane.b32.xlu0 %v2351, 126
        %v2379 = vpop.permute.xlu0 %2378
        %2380 = vrot.lane.b32.xlu0 %v2352, 126
        %v2381 = vpop.permute.xlu0 %2380
        %2382 = vrot.lane.b32.xlu0 %v2354, 126
        %v2383 = vpop.permute.xlu0 %2382
        %2384 = vrot.lane.b32.xlu0 %v2355, 126
        %v2385 = vpop.permute.xlu0 %2384
        %v2386 = vsel %vm986, %v2379, %v2381
        %v2387 = vsel %vm986, %v2383, %v2385
        %v2388 = vld [vmem:[%s16] sm:$0xf]
        %v2389 = vld [vmem:[%s17] sm:$0xff]
        %2391 = vset.pattern.permute.xlu0 0
        %2392 = vperm.xlu0 %2391, %v2389
        %v2393 = vpop.permute.xlu0 %2392
        %2395 = vrot.lane.b32.xlu0 %v2350, 2
        %v2396 = vpop.permute.xlu0 %2395
        %2397 = vrot.lane.b32.xlu0 %v2351, 2
        %v2398 = vpop.permute.xlu0 %2397
        %2399 = vrot.lane.b32.xlu0 %v2352, 2
        %v2400 = vpop.permute.xlu0 %2399
        %2401 = vrot.lane.b32.xlu0 %v2353, 2
        %v2402 = vpop.permute.xlu0 %2401
        %2403 = vrot.lane.b32.xlu0 %v2354, 2
        %v2404 = vpop.permute.xlu0 %2403
        %2405 = vrot.lane.b32.xlu0 %v2355, 2
        %v2406 = vpop.permute.xlu0 %2405
        %2407 = vrot.lane.b32.xlu0 %v2374, 2
        %v2408 = vpop.permute.xlu0 %2407
        %2409 = vrot.lane.b32.xlu0 %v2375, 2
        %v2410 = vpop.permute.xlu0 %2409
        %2411 = vrot.lane.b32.xlu0 %v2367, 2
        %v2412 = vpop.permute.xlu0 %2411
        %2413 = vrot.lane.b32.xlu0 %v2376, 2
        %v2414 = vpop.permute.xlu0 %2413
        %2415 = vrot.lane.b32.xlu0 %v2377, 2
        %v2416 = vpop.permute.xlu0 %2415
        %2417 = vrot.lane.b32.xlu0 %v2373, 2
        %v2418 = vpop.permute.xlu0 %2417
        %2419 = vrot.lane.b32.xlu0 %v2379, 2
        %v2420 = vpop.permute.xlu0 %2419
        %2421 = vrot.lane.b32.xlu0 %v2386, 2
        %v2422 = vpop.permute.xlu0 %2421
        %2423 = vrot.lane.b32.xlu0 %v2381, 2
        %v2424 = vpop.permute.xlu0 %2423
        %2425 = vrot.lane.b32.xlu0 %v2383, 2
        %v2426 = vpop.permute.xlu0 %2425
        %2427 = vrot.lane.b32.xlu0 %v2387, 2
        %v2428 = vpop.permute.xlu0 %2427
        %2429 = vrot.lane.b32.xlu0 %v2385, 2
        %v2430 = vpop.permute.xlu0 %2429
        %v2431 = vsel %vm751, %v2396, %v2398
        %v2432 = vsel %vm751, %v2398, %v2400
        %v2433 = vsel %vm751, %v2402, %v2404
        %v2434 = vsel %vm751, %v2404, %v2406
        %v2435 = vsel %vm751, %v2408, %v2410
        %v2436 = vsel %vm751, %v2410, %v2412
        %v2437 = vsel %vm751, %v2414, %v2416
        %v2438 = vsel %vm751, %v2416, %v2418
        %v2439 = vsel %vm751, %v2420, %v2422
        %v2440 = vsel %vm751, %v2422, %v2424
        %v2441 = vsel %vm751, %v2426, %v2428
        %v2442 = vsel %vm751, %v2428, %v2430
        %v2456 = vsel %vm1087, %v2388, 0
        %2458 = vmatprep.subr.bf16.mxu0 %v2432
        %2459 = vmatpush1.bf16.msra.mxu0 %v2431
        %2460 = vmatprep.subr.bf16.mxu0 %v2434
        %2461 = vmatpush1.bf16.msra.mxu0 %v2433
        %2462 = vmatprep.subr.bf16.mxu0 %v2436
        %2463 = vmatpush1.bf16.msra.mxu0 %v2435
        %2464 = vmatprep.subr.bf16.mxu0 %v2438
        %2465 = vmatpush1.bf16.msra.mxu0 %v2437
        %2466 = vmatprep.subr.bf16.mxu0 %v2440
        %2467 = vmatpush1.bf16.msra.mxu0 %v2439
        %2468 = vmatprep.subr.bf16.mxu0 %v2442
        %2469 = vmatpush1.bf16.msra.mxu0 %v2441
        %2470 = vmatprep.subr.bf16.mxu0 0
        %2471 = vmatpush1.bf16.msra.mxu0 0
        %2472 = vmatprep.subr.bf16.mxu0 0
        %2473 = vmatpush1.bf16.msra.mxu0 0
        %2474 = vmatprep.subr.bf16.mxu0 0
        %2475 = vmatpush1.bf16.msra.mxu0 0
        %2476 = vmatprep.subr.bf16.mxu0 0
        %2477 = vmatpush1.bf16.msra.mxu0 0
        %2478 = vmatprep.subr.bf16.mxu0 0
        %2479 = vmatpush1.bf16.msra.mxu0 0
        %2480 = vmatprep.subr.bf16.mxu0 0
        %2481 = vmatpush1.bf16.msra.mxu0 0
        %2482 = vmatprep.subr.bf16.mxu0 0
        %2483 = vmatpush1.bf16.msra.mxu0 0
        %2484 = vmatprep.subr.bf16.mxu0 0
        %2485 = vmatpush1.bf16.msra.mxu0 0
        %2486 = vmatprep.subr.bf16.mxu0 0
        %2487 = vmatpush1.bf16.msra.mxu0 0
        %2488 = vmatprep.subr.bf16.mxu0 0
        %2489 = vmatpush1.bf16.msra.mxu0 0
        %2490 = vmatprep.mubr.bf16.mxu0 0
        %2491 = vmatmul.mubr.bf16.gmra.mrb[0].mxu0 %v2456
        %v2492 = vpop.f32.mrb[0].mxu0
        %v2493 = vpop.f32.mrb[0].mxu0
        %v2494 = vadd.f32 %v2393, %v2493
        %v2495 = vpop.f32.mrb[0].mxu0
        %v2496 = vpop.f32.mrb[0].mxu0
        %2497 = vdwg.mxu0
        %2498 = vst [vmem:[%s618] sm:$0xff] %v2494
        %s2499 = sand.u32 %s448, 1
        %s2500 = scalar_lea.sflag [#allocation4], %s2499
        %s2501 = sand.u32 %s448, 1
        %s2502 = smul.addr %s2501, 8
        %s2503 = scalar_lea.vmem [#allocation3], %s2502
        // Predicated region
        $region121: #{tpu_custom_call.1} parent=91 // pred_check
          %p2504 = pneg %p458
        $region122: #{tpu_custom_call.1} parent=91 // pred_check_branch
          %2506 = sbr.rel (%p2504) target = $region124
        $region123: #{tpu_custom_call.1} parent=91 // pred_region
          %s2508 = ssub.s32 128, 128
          %2509 = vsyncadd %s2500, %s2508
          %s2510 = sadd.s32 %s37, %s36
          %s2511 = smul.addr %s2510, 128
          %s2512 = scalar_lea.hbm %s18, %s2511
          %s2514 = sshll.u32 %s2503, 4
          %s2515 = int_to_ptr.vmem [resolvable:$true] %s2514
          %2517 = dma.vmem_to_hbm [thread:$0]  %s2515, 128, %s2512, %s2500
        $region124: #{tpu_custom_call.1} parent=91 // pred_fallthru
          _
      $region92: #{tpu_custom_call.1} parent=5 // pred_fallthru
        _
      %p2518 = scmp.le.s32.totalorder 2, %s27
      // Predicated region
      $region125: #{tpu_custom_call.1} parent=5 // pred_check
        %p2519 = pneg %p2518
      $region126: #{tpu_custom_call.1} parent=5 // pred_check_branch
        %2521 = sbr.rel (%p2519) target = $region128
      $region127: #{tpu_custom_call.1} parent=5 // pred_region
        %s2522 = ssub.s32 %s27, 2
        // Predicated region
        $region129: #{tpu_custom_call.1} parent=127 // pred_check
          %p2523 = pneg %p464
        $region130: #{tpu_custom_call.1} parent=127 // pred_check_branch
          %2525 = sbr.rel (%p2523) target = $region132
        $region131: #{tpu_custom_call.1} parent=127 // pred_region
          %s2526 = sand.u32 %s449, 1
          %s2527 = scalar_lea.sflag [#allocation4], %s2526
          %s2528 = sand.u32 %s449, 1
          %s2529 = smul.addr %s2528, 8
          %s2530 = scalar_lea.vmem [#allocation3], %s2529
          %2531 = dma.done %s2527, 128
        $region132: #{tpu_custom_call.1} parent=127 // pred_fallthru
          _
      $region128: #{tpu_custom_call.1} parent=5 // pred_fallthru
        _
    $region6: #{tpu_custom_call.1} parent=1 // loop_footer
      %s31 = sadd.s32 1, %s27
    $region7: #{tpu_custom_call.1} parent=1 // loop_footer_branch
      %26 = sbr.rel target = $region3
    $region8: #{tpu_custom_call.1} parent=1 // loop_exit
      _
    %2532 = vsyncpa [#allocation4], 1
    %s2533 = scalar_lea.sflag [#allocation4], 1
    %2534 = vsyncpa %s2533, 1

</llo_original>
